<compile_context>
chip_gen: v7x
topology: tpu7x:2x2x1
jax: 0.10.0
libtpu: 0.0.40
codegen_flags: <defaults>
</compile_context>

<pallas_src>
import functools
import math

import jax
import jax.numpy as jnp
from jax.experimental import pallas as pl
from jax.experimental.pallas import tpu as pltpu

NUM_NODES = 8      # L  (sequence length / number of graph nodes)
EMBED_DIM = 48     # E
NUM_HEADS = 3      # H
HEAD_DIM = EMBED_DIM // NUM_HEADS
NUM_LAYERS = 2


def _graph_transformer_kernel(x_ref, mask_ref, wqkv_ref, bqkv_ref, wo_ref, bo_ref,
                              out_ref, *, num_layers, num_heads):
    """Runs the full num_layers MHA stack on a resident (L, E) activation."""
    L, E = x_ref.shape
    three_h = 3 * num_heads

    x = x_ref[...]                       # already f32, no cast
    mask = mask_ref[...][None]           # (1, L, L) additive float attn_mask

    # num_layers is tiny & static -> unrolled; X never round-trips through HBM.
    for layer in range(num_layers):
        wqkv = wqkv_ref[layer]           # (3H, E, hd)  [q-heads | k-heads | v-heads]
        bqkv = bqkv_ref[layer]           # (3H, 1, hd)
        wo = wo_ref[layer]               # (H, hd, E)
        bo = bo_ref[layer]               # (1, E)

        # Fused, head-major QKV projection: one batched MXU pass, no lane slicing.
        xb = jnp.broadcast_to(x, (three_h, L, E))
        qkv = jnp.einsum("hle,hed->hld", xb, wqkv,
                         preferred_element_type=jnp.float32) + bqkv    # (3H, L, hd)
        q = qkv[:num_heads]
        k = qkv[num_heads:2 * num_heads]
        v = qkv[2 * num_heads:]

        # Scores: contraction over the last dims (no materialized K transpose).
        # 1/sqrt(head_dim) is folded into Wq/bq by the wrapper.
        s = jnp.einsum("hqd,hkd->hqk", q, k,
                       preferred_element_type=jnp.float32) + mask      # (H, L, L)
        s = s - jnp.max(s, axis=-1, keepdims=True)                     # stable softmax
        p = jnp.exp(s)
        p = p * pl.reciprocal(jnp.sum(p, axis=-1, keepdims=True), approx=True)

        o = jnp.einsum("hqk,hkd->hqd", p, v,
                       preferred_element_type=jnp.float32)             # (H, L, hd)

        # Output projection without a lane-axis concat:  sum_h  o_h @ Wo_h.
        out_h = jnp.einsum("hld,hde->hle", o, wo,
                           preferred_element_type=jnp.float32)         # (H, L, E)
        x = jnp.sum(out_h, axis=0) + bo                                # (L, E)

    out_ref[...] = x.astype(out_ref.dtype)


@functools.partial(jax.jit, static_argnames=("num_heads", "num_layers"))
def graph_transformer(X, adj_matrix, w_qkv, b_qkv, w_out, b_out, *,
                      num_heads, num_layers):
    """Forward pass: X, _ = attn_i(X, X, X, attn_mask=adj_matrix) for each layer,
    fused into one pallas_call (6 operands total for the whole stack)."""
    L, E = X.shape
    kernel = functools.partial(_graph_transformer_kernel,
                               num_layers=num_layers, num_heads=num_heads)
    vmem = pl.BlockSpec(memory_space=pltpu.MemorySpace.VMEM)
    return pl.pallas_call(
        kernel,
        out_shape=jax.ShapeDtypeStruct((L, E), X.dtype),
        in_specs=[vmem] * 6,
        out_specs=vmem,
    )(X, adj_matrix, w_qkv, b_qkv, w_out, b_out)


def _init_layer_params(key, embed_dim):
    """Deterministic synthetic init mirroring nn.MultiheadAttention shapes.
    Weights stored transposed as (in_features, out_features); biases zero."""
    keys = jax.random.split(key, 4)
    bound = 1.0 / math.sqrt(embed_dim)
    wq = jax.random.uniform(keys[0], (embed_dim, embed_dim), jnp.float32, -bound, bound)
    wk = jax.random.uniform(keys[1], (embed_dim, embed_dim), jnp.float32, -bound, bound)
    wv = jax.random.uniform(keys[2], (embed_dim, embed_dim), jnp.float32, -bound, bound)
    wo = jax.random.uniform(keys[3], (embed_dim, embed_dim), jnp.float32, -bound, bound)
    bq = jnp.zeros((embed_dim,), jnp.float32)
    bk = jnp.zeros((embed_dim,), jnp.float32)
    bv = jnp.zeros((embed_dim,), jnp.float32)
    bo = jnp.zeros((embed_dim,), jnp.float32)
    return (wq, wk, wv, bq, bk, bv, wo, bo)


def _pack_layer(params, num_heads):
    """PyTorch-layout params -> head-major fused kernel layout (softmax scale folded)."""
    wq, wk, wv, bq, bk, bv, wo, bo = params
    E = wq.shape[0]
    hd = E // num_heads
    scale = 1.0 / math.sqrt(hd)

    def w_heads(w):                       # (E, E) -> (H, E, hd)
        return w.reshape(E, num_heads, hd).transpose(1, 0, 2)

    def b_heads(b):                       # (E,) -> (H, 1, hd)
        return b.reshape(num_heads, 1, hd)

    w_qkv = jnp.concatenate([w_heads(wq) * scale, w_heads(wk), w_heads(wv)], axis=0)
    b_qkv = jnp.concatenate([b_heads(bq) * scale, b_heads(bk), b_heads(bv)], axis=0)
    w_out = wo.reshape(num_heads, hd, E)  # wo row-block per head
    b_out = bo.reshape(1, E)
    return w_qkv, b_qkv, w_out, b_out


def _mha_reference(x, params, mask, num_heads):
    """Pure-JAX reference of one PyTorch MultiheadAttention layer (q=k=v=x)."""
    wq, wk, wv, bq, bk, bv, wo, bo = params
    L, E = x.shape
    hd = E // num_heads
    q = x @ wq + bq
    k = x @ wk + bk
    v = x @ wv + bv
    q = q.reshape(L, num_heads, hd).transpose(1, 0, 2)
    k = k.reshape(L, num_heads, hd).transpose(1, 0, 2)
    v = v.reshape(L, num_heads, hd).transpose(1, 0, 2)
    s = jnp.einsum("hqd,hkd->hqk", q, k) / math.sqrt(hd) + mask[None]
    p = jax.nn.softmax(s, axis=-1)
    o = jnp.einsum("hqk,hkd->hqd", p, v).transpose(1, 0, 2).reshape(L, E)
    return o @ wo + bo


if __name__ == "__main__":
    root = jax.random.PRNGKey(0)
    k_x, k_p = jax.random.split(root)

    # X = torch.randn(num_nodes, input_dim); adj_matrix = torch.zeros(num_nodes, num_nodes)
    X = jax.random.normal(k_x, (NUM_NODES, EMBED_DIM), jnp.float32)
    adj_matrix = jnp.zeros((NUM_NODES, NUM_NODES), jnp.float32)

    layer_keys = jax.random.split(k_p, NUM_LAYERS)
    layer_params = [_init_layer_params(layer_keys[i], EMBED_DIM) for i in range(NUM_LAYERS)]

    # One-time packing of all layer weights into the fused, stacked kernel layout.
    packed = [_pack_layer(p, NUM_HEADS) for p in layer_params]
    w_qkv = jnp.stack([p[0] for p in packed], axis=0)   # (num_layers, 3H, E, hd)
    b_qkv = jnp.stack([p[1] for p in packed], axis=0)   # (num_layers, 3H, 1, hd)
    w_out = jnp.stack([p[2] for p in packed], axis=0)   # (num_layers, H, hd, E)
    b_out = jnp.stack([p[3] for p in packed], axis=0)   # (num_layers, 1, E)

    out = graph_transformer(X, adj_matrix, w_qkv, b_qkv, w_out, b_out,
                            num_heads=NUM_HEADS, num_layers=NUM_LAYERS)
    out = jax.block_until_ready(out)

    # Cross-check against a pure-JAX reference of the same forward pass.
    ref = X
    for params in layer_params:
        ref = _mha_reference(ref, params, adj_matrix, NUM_HEADS)
    # approx=True softmax reciprocal -> slightly looser tolerance than the exact-div reference.
    assert jnp.allclose(out, ref, atol=1e-3, rtol=1e-3), "Pallas kernel mismatch"

    print("KERNEL_OK")
</pallas_src>

<mosaic_0001>
module attributes {stable_mosaic.version = 11 : i64} {
  func.func @_graph_transformer_kernel(%arg0: memref<8x48xf32, #tpu.memory_space<vmem>>, %arg1: memref<8x8xf32, #tpu.memory_space<vmem>>, %arg2: memref<2x9x48x16xf32, #tpu.memory_space<vmem>>, %arg3: memref<2x9x1x16xf32, #tpu.memory_space<vmem>>, %arg4: memref<2x3x16x48xf32, #tpu.memory_space<vmem>>, %arg5: memref<2x1x48xf32, #tpu.memory_space<vmem>>, %arg6: memref<8x48xf32, #tpu.memory_space<vmem>>) attributes {dimension_semantics = [], scalar_prefetch = 0 : i64, scratch_operands = 0 : i64, tpu.core_type = #tpu.core_type<tc>} {
    %c0 = arith.constant 0 : index
    %c0_0 = arith.constant 0 : index
    %0 = vector.load %arg0[%c0, %c0_0] : memref<8x48xf32, #tpu.memory_space<vmem>>, vector<8x48xf32>
    %c0_1 = arith.constant 0 : index
    %c0_2 = arith.constant 0 : index
    %1 = vector.load %arg1[%c0_1, %c0_2] : memref<8x8xf32, #tpu.memory_space<vmem>>, vector<8x8xf32>
    %2 = vector.shape_cast %1 : vector<8x8xf32> to vector<1x8x8xf32>
    %c0_3 = arith.constant 0 : index
    %c0_4 = arith.constant 0 : index
    %c0_5 = arith.constant 0 : index
    %c0_6 = arith.constant 0 : index
    %3 = vector.load %arg2[%c0_3, %c0_4, %c0_5, %c0_6] : memref<2x9x48x16xf32, #tpu.memory_space<vmem>>, vector<1x9x48x16xf32>
    %4 = vector.shape_cast %3 : vector<1x9x48x16xf32> to vector<9x48x16xf32>
    %c0_7 = arith.constant 0 : index
    %c0_8 = arith.constant 0 : index
    %c0_9 = arith.constant 0 : index
    %c0_10 = arith.constant 0 : index
    %5 = vector.load %arg3[%c0_7, %c0_8, %c0_9, %c0_10] : memref<2x9x1x16xf32, #tpu.memory_space<vmem>>, vector<1x9x1x16xf32>
    %6 = vector.shape_cast %5 : vector<1x9x1x16xf32> to vector<9x1x16xf32>
    %c0_11 = arith.constant 0 : index
    %c0_12 = arith.constant 0 : index
    %c0_13 = arith.constant 0 : index
    %c0_14 = arith.constant 0 : index
    %7 = vector.load %arg4[%c0_11, %c0_12, %c0_13, %c0_14] : memref<2x3x16x48xf32, #tpu.memory_space<vmem>>, vector<1x3x16x48xf32>
    %8 = vector.shape_cast %7 : vector<1x3x16x48xf32> to vector<3x16x48xf32>
    %c0_15 = arith.constant 0 : index
    %c0_16 = arith.constant 0 : index
    %c0_17 = arith.constant 0 : index
    %9 = vector.load %arg5[%c0_15, %c0_16, %c0_17] : memref<2x1x48xf32, #tpu.memory_space<vmem>>, vector<1x1x48xf32>
    %10 = vector.shape_cast %9 : vector<1x1x48xf32> to vector<1x48xf32>
    %11 = vector.shape_cast %0 : vector<8x48xf32> to vector<1x8x48xf32>
    %12 = vector.broadcast %11 : vector<1x8x48xf32> to vector<9x8x48xf32>
    "tpu.trace_start"() <{level = 10 : i32, message = "hle,hed->hld"}> : () -> ()
    %cst = arith.constant dense<0.000000e+00> : vector<9x8x16xf32>
    %13 = tpu.matmul %12, %4, %cst {dimension_numbers = #tpu.dot_dimension_numbers<[2], [1], [1], [2], [0, 0, 0, 1, 1, 2], [0], [0]>} : vector<9x8x48xf32>, vector<9x48x16xf32>, vector<9x8x16xf32> -> vector<9x8x16xf32>
    "tpu.trace_stop"() : () -> ()
    %14 = vector.broadcast %6 : vector<9x1x16xf32> to vector<9x8x16xf32>
    %15 = arith.addf %13, %14 : vector<9x8x16xf32>
    %16 = vector.extract_strided_slice %15 {offsets = [0, 0, 0], sizes = [3, 8, 16], strides = [1, 1, 1]} : vector<9x8x16xf32> to vector<3x8x16xf32>
    %17 = vector.extract_strided_slice %15 {offsets = [3, 0, 0], sizes = [3, 8, 16], strides = [1, 1, 1]} : vector<9x8x16xf32> to vector<3x8x16xf32>
    %18 = vector.extract_strided_slice %15 {offsets = [6, 0, 0], sizes = [3, 8, 16], strides = [1, 1, 1]} : vector<9x8x16xf32> to vector<3x8x16xf32>
    "tpu.trace_start"() <{level = 10 : i32, message = "hqd,hkd->hqk"}> : () -> ()
    %cst_18 = arith.constant dense<0.000000e+00> : vector<3x8x8xf32>
    %19 = tpu.matmul %16, %17, %cst_18 {dimension_numbers = #tpu.dot_dimension_numbers<[2], [2], [1], [1], [0, 0, 0, 1, 1, 1], [0], [0]>} : vector<3x8x16xf32>, vector<3x8x16xf32>, vector<3x8x8xf32> -> vector<3x8x8xf32>
    "tpu.trace_stop"() : () -> ()
    %20 = vector.broadcast %2 : vector<1x8x8xf32> to vector<3x8x8xf32>
    %21 = arith.addf %19, %20 : vector<3x8x8xf32>
    %cst_19 = arith.constant dense<0xFF800000> : vector<3x8xf32>
    %22 = vector.multi_reduction <maximumf>, %21, %cst_19 [2] : vector<3x8x8xf32> to vector<3x8xf32>
    %23 = vector.shape_cast %22 : vector<3x8xf32> to vector<3x8x1xf32>
    %24 = vector.broadcast %23 : vector<3x8x1xf32> to vector<3x8x8xf32>
    %25 = arith.subf %21, %24 : vector<3x8x8xf32>
    %26 = math.exp %25 : vector<3x8x8xf32>
    %cst_20 = arith.constant dense<0.000000e+00> : vector<3x8xf32>
    %27 = vector.multi_reduction <add>, %26, %cst_20 [2] : vector<3x8x8xf32> to vector<3x8xf32>
    %28 = vector.shape_cast %27 : vector<3x8xf32> to vector<3x8x1xf32>
    %29 = tpu.reciprocal %28 {approx = true} : vector<3x8x1xf32> -> vector<3x8x1xf32>
    %30 = vector.broadcast %29 : vector<3x8x1xf32> to vector<3x8x8xf32>
    %31 = arith.mulf %26, %30 : vector<3x8x8xf32>
    "tpu.trace_start"() <{level = 10 : i32, message = "hqk,hkd->hqd"}> : () -> ()
    %cst_21 = arith.constant dense<0.000000e+00> : vector<3x8x16xf32>
    %32 = tpu.matmul %31, %18, %cst_21 {dimension_numbers = #tpu.dot_dimension_numbers<[2], [1], [1], [2], [0, 0, 0, 1, 1, 2], [0], [0]>} : vector<3x8x8xf32>, vector<3x8x16xf32>, vector<3x8x16xf32> -> vector<3x8x16xf32>
    "tpu.trace_stop"() : () -> ()
    "tpu.trace_start"() <{level = 10 : i32, message = "hld,hde->hle"}> : () -> ()
    %cst_22 = arith.constant dense<0.000000e+00> : vector<3x8x48xf32>
    %33 = tpu.matmul %32, %8, %cst_22 {dimension_numbers = #tpu.dot_dimension_numbers<[2], [1], [1], [2], [0, 0, 0, 1, 1, 2], [0], [0]>} : vector<3x8x16xf32>, vector<3x16x48xf32>, vector<3x8x48xf32> -> vector<3x8x48xf32>
    "tpu.trace_stop"() : () -> ()
    %cst_23 = arith.constant dense<0.000000e+00> : vector<8x48xf32>
    %34 = vector.multi_reduction <add>, %33, %cst_23 [0] : vector<3x8x48xf32> to vector<8x48xf32>
    %35 = vector.broadcast %10 : vector<1x48xf32> to vector<8x48xf32>
    %36 = arith.addf %34, %35 : vector<8x48xf32>
    %c1 = arith.constant 1 : index
    %c0_24 = arith.constant 0 : index
    %c0_25 = arith.constant 0 : index
    %c0_26 = arith.constant 0 : index
    %37 = vector.load %arg2[%c1, %c0_24, %c0_25, %c0_26] : memref<2x9x48x16xf32, #tpu.memory_space<vmem>>, vector<1x9x48x16xf32>
    %38 = vector.shape_cast %37 : vector<1x9x48x16xf32> to vector<9x48x16xf32>
    %c1_27 = arith.constant 1 : index
    %c0_28 = arith.constant 0 : index
    %c0_29 = arith.constant 0 : index
    %c0_30 = arith.constant 0 : index
    %39 = vector.load %arg3[%c1_27, %c0_28, %c0_29, %c0_30] : memref<2x9x1x16xf32, #tpu.memory_space<vmem>>, vector<1x9x1x16xf32>
    %40 = vector.shape_cast %39 : vector<1x9x1x16xf32> to vector<9x1x16xf32>
    %c1_31 = arith.constant 1 : index
    %c0_32 = arith.constant 0 : index
    %c0_33 = arith.constant 0 : index
    %c0_34 = arith.constant 0 : index
    %41 = vector.load %arg4[%c1_31, %c0_32, %c0_33, %c0_34] : memref<2x3x16x48xf32, #tpu.memory_space<vmem>>, vector<1x3x16x48xf32>
    %42 = vector.shape_cast %41 : vector<1x3x16x48xf32> to vector<3x16x48xf32>
    %c1_35 = arith.constant 1 : index
    %c0_36 = arith.constant 0 : index
    %c0_37 = arith.constant 0 : index
    %43 = vector.load %arg5[%c1_35, %c0_36, %c0_37] : memref<2x1x48xf32, #tpu.memory_space<vmem>>, vector<1x1x48xf32>
    %44 = vector.shape_cast %43 : vector<1x1x48xf32> to vector<1x48xf32>
    %45 = vector.shape_cast %36 : vector<8x48xf32> to vector<1x8x48xf32>
    %46 = vector.broadcast %45 : vector<1x8x48xf32> to vector<9x8x48xf32>
    "tpu.trace_start"() <{level = 10 : i32, message = "hle,hed->hld"}> : () -> ()
    %cst_38 = arith.constant dense<0.000000e+00> : vector<9x8x16xf32>
    %47 = tpu.matmul %46, %38, %cst_38 {dimension_numbers = #tpu.dot_dimension_numbers<[2], [1], [1], [2], [0, 0, 0, 1, 1, 2], [0], [0]>} : vector<9x8x48xf32>, vector<9x48x16xf32>, vector<9x8x16xf32> -> vector<9x8x16xf32>
    "tpu.trace_stop"() : () -> ()
    %48 = vector.broadcast %40 : vector<9x1x16xf32> to vector<9x8x16xf32>
    %49 = arith.addf %47, %48 : vector<9x8x16xf32>
    %50 = vector.extract_strided_slice %49 {offsets = [0, 0, 0], sizes = [3, 8, 16], strides = [1, 1, 1]} : vector<9x8x16xf32> to vector<3x8x16xf32>
    %51 = vector.extract_strided_slice %49 {offsets = [3, 0, 0], sizes = [3, 8, 16], strides = [1, 1, 1]} : vector<9x8x16xf32> to vector<3x8x16xf32>
    %52 = vector.extract_strided_slice %49 {offsets = [6, 0, 0], sizes = [3, 8, 16], strides = [1, 1, 1]} : vector<9x8x16xf32> to vector<3x8x16xf32>
    "tpu.trace_start"() <{level = 10 : i32, message = "hqd,hkd->hqk"}> : () -> ()
    %cst_39 = arith.constant dense<0.000000e+00> : vector<3x8x8xf32>
    %53 = tpu.matmul %50, %51, %cst_39 {dimension_numbers = #tpu.dot_dimension_numbers<[2], [2], [1], [1], [0, 0, 0, 1, 1, 1], [0], [0]>} : vector<3x8x16xf32>, vector<3x8x16xf32>, vector<3x8x8xf32> -> vector<3x8x8xf32>
    "tpu.trace_stop"() : () -> ()
    %54 = vector.broadcast %2 : vector<1x8x8xf32> to vector<3x8x8xf32>
    %55 = arith.addf %53, %54 : vector<3x8x8xf32>
    %cst_40 = arith.constant dense<0xFF800000> : vector<3x8xf32>
    %56 = vector.multi_reduction <maximumf>, %55, %cst_40 [2] : vector<3x8x8xf32> to vector<3x8xf32>
    %57 = vector.shape_cast %56 : vector<3x8xf32> to vector<3x8x1xf32>
    %58 = vector.broadcast %57 : vector<3x8x1xf32> to vector<3x8x8xf32>
    %59 = arith.subf %55, %58 : vector<3x8x8xf32>
    %60 = math.exp %59 : vector<3x8x8xf32>
    %cst_41 = arith.constant dense<0.000000e+00> : vector<3x8xf32>
    %61 = vector.multi_reduction <add>, %60, %cst_41 [2] : vector<3x8x8xf32> to vector<3x8xf32>
    %62 = vector.shape_cast %61 : vector<3x8xf32> to vector<3x8x1xf32>
    %63 = tpu.reciprocal %62 {approx = true} : vector<3x8x1xf32> -> vector<3x8x1xf32>
    %64 = vector.broadcast %63 : vector<3x8x1xf32> to vector<3x8x8xf32>
    %65 = arith.mulf %60, %64 : vector<3x8x8xf32>
    "tpu.trace_start"() <{level = 10 : i32, message = "hqk,hkd->hqd"}> : () -> ()
    %cst_42 = arith.constant dense<0.000000e+00> : vector<3x8x16xf32>
    %66 = tpu.matmul %65, %52, %cst_42 {dimension_numbers = #tpu.dot_dimension_numbers<[2], [1], [1], [2], [0, 0, 0, 1, 1, 2], [0], [0]>} : vector<3x8x8xf32>, vector<3x8x16xf32>, vector<3x8x16xf32> -> vector<3x8x16xf32>
    "tpu.trace_stop"() : () -> ()
    "tpu.trace_start"() <{level = 10 : i32, message = "hld,hde->hle"}> : () -> ()
    %cst_43 = arith.constant dense<0.000000e+00> : vector<3x8x48xf32>
    %67 = tpu.matmul %66, %42, %cst_43 {dimension_numbers = #tpu.dot_dimension_numbers<[2], [1], [1], [2], [0, 0, 0, 1, 1, 2], [0], [0]>} : vector<3x8x16xf32>, vector<3x16x48xf32>, vector<3x8x48xf32> -> vector<3x8x48xf32>
    "tpu.trace_stop"() : () -> ()
    %cst_44 = arith.constant dense<0.000000e+00> : vector<8x48xf32>
    %68 = vector.multi_reduction <add>, %67, %cst_44 [0] : vector<3x8x48xf32> to vector<8x48xf32>
    %69 = vector.broadcast %44 : vector<1x48xf32> to vector<8x48xf32>
    %70 = arith.addf %68, %69 : vector<8x48xf32>
    %c0_45 = arith.constant 0 : index
    %c0_46 = arith.constant 0 : index
    %71 = vector.load %arg6[%c0_45, %c0_46] : memref<8x48xf32, #tpu.memory_space<vmem>>, vector<8x48xf32>
    tpu.vector_store %arg6[%c0_45, %c0_46], %70 {strides = array<i32>} : memref<8x48xf32, #tpu.memory_space<vmem>>, vector<8x48xf32>,
    return
  }
}

</mosaic_0001>

<llo_original>
// kernel: graph_transformer.1
$region0: #{graph_transformer.1}
  #allocation0 [shape = 'u32[]', space=smem, size = 0x4, offset = 0x4, fixed_abs, tag = 'smem constant byte address 0x4 - core index']
  #allocation1 [shape = 'u32[144,128]{1,0:T(1,128)}', space=vmem, size = 0x12000, scoped, tag = 'internal scratch']
  %s0 = inlined_call_operand.vmem [shape: f32[8,48], index: 0, kind: input, shape index: {}]
  %s1 = inlined_call_operand.vmem [shape: f32[8,8], index: 1, kind: input, shape index: {}]
  %s2 = inlined_call_operand.vmem [shape: f32[2,9,48,16], index: 2, kind: input, shape index: {}]
  %s3 = inlined_call_operand.vmem [shape: f32[2,9,1,16], index: 3, kind: input, shape index: {}]
  %s4 = inlined_call_operand.vmem [shape: f32[2,3,16,48], index: 4, kind: input, shape index: {}]
  %s5 = inlined_call_operand.vmem [shape: f32[2,1,48], index: 5, kind: input, shape index: {}]
  %s6 = inlined_call_operand.hbm [shape: f32[8,48], index: 6, kind: output, shape index: {}]
  %s7 = sld [smem:[#allocation0]]
  $region34: #{graph_transformer.1} parent=0
    _
  %s9 = ssub.s32 1, %s7
  %s10 = scalar_select 0, %s9, %s7
  $region1: #{graph_transformer.1} parent=0
    #allocation2 [shape = 'u8[4096]{0}', space=vmem, size = 0x1000, scoped, tag = 'output window, operand 0, single buffered']
    #allocation3 [shape = 's32[1]{0}', space=sflag, size = 0x4, scoped, tag = 'scoped memory for graph_transformer.1']
    %11 = vsyncpa [#allocation3], 0
    // Predicated region
    $region2: #{graph_transformer.1} parent=1 // pred_check
      _
    $region3: #{graph_transformer.1} parent=1 // pred_check_branch
      %13 = sbr.rel (0) target = $region5
    $region4: #{graph_transformer.1} parent=1 // pred_region
      _
    $region5: #{graph_transformer.1} parent=1 // pred_fallthru
      _
    // Predicated region
    $region6: #{graph_transformer.1} parent=1 // pred_check
      _
    $region7: #{graph_transformer.1} parent=1 // pred_check_branch
      %15 = sbr.rel (0) target = $region9
    $region8: #{graph_transformer.1} parent=1 // pred_region
      _
    $region9: #{graph_transformer.1} parent=1 // pred_fallthru
      _
    // Predicated region
    $region10: #{graph_transformer.1} parent=1 // pred_check
      _
    $region11: #{graph_transformer.1} parent=1 // pred_check_branch
      %17 = sbr.rel (0) target = $region13
    $region12: #{graph_transformer.1} parent=1 // pred_region
      _
    $region13: #{graph_transformer.1} parent=1 // pred_fallthru
      _
    // Predicated region
    $region14: #{graph_transformer.1} parent=1 // pred_check
      _
    $region15: #{graph_transformer.1} parent=1 // pred_check_branch
      %19 = sbr.rel (0) target = $region17
    $region16: #{graph_transformer.1} parent=1 // pred_region
      _
    $region17: #{graph_transformer.1} parent=1 // pred_fallthru
      _
    // Predicated region
    $region18: #{graph_transformer.1} parent=1 // pred_check
      _
    $region19: #{graph_transformer.1} parent=1 // pred_check_branch
      %21 = sbr.rel (0) target = $region21
    $region20: #{graph_transformer.1} parent=1 // pred_region
      _
    $region21: #{graph_transformer.1} parent=1 // pred_fallthru
      _
    // Predicated region
    $region22: #{graph_transformer.1} parent=1 // pred_check
      _
    $region23: #{graph_transformer.1} parent=1 // pred_check_branch
      %23 = sbr.rel (0) target = $region25
    $region24: #{graph_transformer.1} parent=1 // pred_region
      _
    $region25: #{graph_transformer.1} parent=1 // pred_fallthru
      _
    %v24 = vld [vmem:[%s0] sm:$0xff]
    %v25 = vld [vmem:[%s1] sm:$0xff]
    %v26 = vld [vmem:[%s2] sm:$0xff]
    %v27 = vld [vmem:[%s2 + $0x8] sm:$0xff]
    %v28 = vld [vmem:[%s2 + $0x10] sm:$0xff]
    %v29 = vld [vmem:[%s2 + $0x18] sm:$0xff]
    %v30 = vld [vmem:[%s2 + $0x20] sm:$0xff]
    %v31 = vld [vmem:[%s2 + $0x28] sm:$0xff]
    %v32 = vld [vmem:[%s2 + $0x30] sm:$0xff]
    %v33 = vld [vmem:[%s2 + $0x38] sm:$0xff]
    %v34 = vld [vmem:[%s2 + $0x40] sm:$0xff]
    %v35 = vld [vmem:[%s2 + $0x48] sm:$0xff]
    %v36 = vld [vmem:[%s2 + $0x50] sm:$0xff]
    %v37 = vld [vmem:[%s2 + $0x58] sm:$0xff]
    %v38 = vld [vmem:[%s2 + $0x60] sm:$0xff]
    %v39 = vld [vmem:[%s2 + $0x68] sm:$0xff]
    %v40 = vld [vmem:[%s2 + $0x70] sm:$0xff]
    %v41 = vld [vmem:[%s2 + $0x78] sm:$0xff]
    %v42 = vld [vmem:[%s2 + $0x80] sm:$0xff]
    %v43 = vld [vmem:[%s2 + $0x88] sm:$0xff]
    %v44 = vld [vmem:[%s2 + $0x90] sm:$0xff]
    %v45 = vld [vmem:[%s2 + $0x98] sm:$0xff]
    %v46 = vld [vmem:[%s2 + $0xa0] sm:$0xff]
    %v47 = vld [vmem:[%s2 + $0xa8] sm:$0xff]
    %v48 = vld [vmem:[%s2 + $0xb0] sm:$0xff]
    %v49 = vld [vmem:[%s2 + $0xb8] sm:$0xff]
    %v50 = vld [vmem:[%s2 + $0xc0] sm:$0xff]
    %v51 = vld [vmem:[%s2 + $0xc8] sm:$0xff]
    %v52 = vld [vmem:[%s2 + $0xd0] sm:$0xff]
    %v53 = vld [vmem:[%s2 + $0xd8] sm:$0xff]
    %v54 = vld [vmem:[%s2 + $0xe0] sm:$0xff]
    %v55 = vld [vmem:[%s2 + $0xe8] sm:$0xff]
    %v56 = vld [vmem:[%s2 + $0xf0] sm:$0xff]
    %v57 = vld [vmem:[%s2 + $0xf8] sm:$0xff]
    %v58 = vld [vmem:[%s2 + $0x100] sm:$0xff]
    %v59 = vld [vmem:[%s2 + $0x108] sm:$0xff]
    %v60 = vld [vmem:[%s2 + $0x110] sm:$0xff]
    %v61 = vld [vmem:[%s2 + $0x118] sm:$0xff]
    %v62 = vld [vmem:[%s2 + $0x120] sm:$0xff]
    %v63 = vld [vmem:[%s2 + $0x128] sm:$0xff]
    %v64 = vld [vmem:[%s2 + $0x130] sm:$0xff]
    %v65 = vld [vmem:[%s2 + $0x138] sm:$0xff]
    %v66 = vld [vmem:[%s2 + $0x140] sm:$0xff]
    %v67 = vld [vmem:[%s2 + $0x148] sm:$0xff]
    %v68 = vld [vmem:[%s2 + $0x150] sm:$0xff]
    %v69 = vld [vmem:[%s2 + $0x158] sm:$0xff]
    %v70 = vld [vmem:[%s2 + $0x160] sm:$0xff]
    %v71 = vld [vmem:[%s2 + $0x168] sm:$0xff]
    %v72 = vld [vmem:[%s2 + $0x170] sm:$0xff]
    %v73 = vld [vmem:[%s2 + $0x178] sm:$0xff]
    %v74 = vld [vmem:[%s2 + $0x180] sm:$0xff]
    %v75 = vld [vmem:[%s2 + $0x188] sm:$0xff]
    %v76 = vld [vmem:[%s2 + $0x190] sm:$0xff]
    %v77 = vld [vmem:[%s2 + $0x198] sm:$0xff]
    %v78 = vld [vmem:[%s2 + $0x1a0] sm:$0xff]
    %v79 = vld [vmem:[%s2 + $0x1a8] sm:$0xff]
    %v80 = vld [vmem:[%s3] sm:$0x1]
    %v81 = vld [vmem:[%s3 + $0x1] sm:$0x1]
    %v82 = vld [vmem:[%s3 + $0x2] sm:$0x1]
    %v83 = vld [vmem:[%s3 + $0x3] sm:$0x1]
    %v84 = vld [vmem:[%s3 + $0x4] sm:$0x1]
    %v85 = vld [vmem:[%s3 + $0x5] sm:$0x1]
    %v86 = vld [vmem:[%s3 + $0x6] sm:$0x1]
    %v87 = vld [vmem:[%s3 + $0x7] sm:$0x1]
    %v88 = vld [vmem:[%s3 + $0x8] sm:$0x1]
    %v89 = vld [vmem:[%s4] sm:$0xff]
    %v90 = vld [vmem:[%s4 + $0x8] sm:$0xff]
    %v91 = vld [vmem:[%s4 + $0x10] sm:$0xff]
    %v92 = vld [vmem:[%s4 + $0x18] sm:$0xff]
    %v93 = vld [vmem:[%s4 + $0x20] sm:$0xff]
    %v94 = vld [vmem:[%s4 + $0x28] sm:$0xff]
    %v95 = vld [vmem:[%s5] sm:$0x1]
    %v105 = vlaneseq
    %v106 = vshrl.u32 %v105, 7
    %v107 = vsub.s32 0, %v106
    %v108 = vrot.slane %v80, %v107
    %v109 = vlaneseq
    %v110 = vshrl.u32 %v109, 7
    %v111 = vsub.s32 0, %v110
    %v112 = vrot.slane %v81, %v111
    %v113 = vlaneseq
    %v114 = vshrl.u32 %v113, 7
    %v115 = vsub.s32 0, %v114
    %v116 = vrot.slane %v82, %v115
    %v117 = vlaneseq
    %v118 = vshrl.u32 %v117, 7
    %v119 = vsub.s32 0, %v118
    %v120 = vrot.slane %v83, %v119
    %v121 = vlaneseq
    %v122 = vshrl.u32 %v121, 7
    %v123 = vsub.s32 0, %v122
    %v124 = vrot.slane %v84, %v123
    %v125 = vlaneseq
    %v126 = vshrl.u32 %v125, 7
    %v127 = vsub.s32 0, %v126
    %v128 = vrot.slane %v85, %v127
    %v129 = vlaneseq
    %v130 = vshrl.u32 %v129, 7
    %v131 = vsub.s32 0, %v130
    %v132 = vrot.slane %v86, %v131
    %v133 = vlaneseq
    %v134 = vshrl.u32 %v133, 7
    %v135 = vsub.s32 0, %v134
    %v136 = vrot.slane %v87, %v135
    %v137 = vlaneseq
    %v138 = vshrl.u32 %v137, 7
    %v139 = vsub.s32 0, %v138
    %v140 = vrot.slane %v88, %v139
    %vm150 = vcmask 392192
    %v152 = vsel %vm150, %v24, 0
    %154 = vmatprep.subr.mxu0 0.0
    %155 = vmatpush1.msra.mxu0 %v26
    %156 = vmatprep.subr.mxu0 0.0
    %157 = vmatpush1.msra.mxu0 %v27
    %158 = vmatprep.subr.mxu0 0.0
    %159 = vmatpush1.msra.mxu0 %v28
    %160 = vmatprep.subr.mxu0 0.0
    %161 = vmatpush1.msra.mxu0 %v29
    %162 = vmatprep.subr.mxu0 0.0
    %163 = vmatpush1.msra.mxu0 %v30
    %164 = vmatprep.subr.mxu0 0.0
    %165 = vmatpush1.msra.mxu0 %v31
    %166 = vmatprep.subr.mxu0 0.0
    %167 = vmatpush1.msra.mxu0 0.0
    %168 = vmatprep.subr.mxu0 0.0
    %169 = vmatpush1.msra.mxu0 0.0
    %170 = vmatprep.subr.mxu0 0.0
    %171 = vmatpush1.msra.mxu0 0.0
    %172 = vmatprep.subr.mxu0 0.0
    %173 = vmatpush1.msra.mxu0 0.0
    %174 = vmatprep.subr.mxu0 0.0
    %175 = vmatpush1.msra.mxu0 0.0
    %176 = vmatprep.subr.mxu0 0.0
    %177 = vmatpush1.msra.mxu0 0.0
    %178 = vmatprep.subr.mxu0 0.0
    %179 = vmatpush1.msra.mxu0 0.0
    %180 = vmatprep.subr.mxu0 0.0
    %181 = vmatpush1.msra.mxu0 0.0
    %182 = vmatprep.subr.mxu0 0.0
    %183 = vmatpush1.msra.mxu0 0.0
    %184 = vmatprep.subr.mxu0 0.0
    %185 = vmatpush1.msra.mxu0 0.0
    %186 = vmatprep.subr.mxu0 0.0
    %187 = vmatpush1.msra.mxu0 0.0
    %188 = vmatprep.subr.mxu0 0.0
    %189 = vmatpush1.msra.mxu0 0.0
    %190 = vmatprep.subr.mxu0 0.0
    %191 = vmatpush1.msra.mxu0 0.0
    %192 = vmatprep.subr.mxu0 0.0
    %193 = vmatpush1.msra.mxu0 0.0
    %194 = vmatprep.subr.mxu0 0.0
    %195 = vmatpush1.msra.mxu0 0.0
    %196 = vmatprep.subr.mxu0 0.0
    %197 = vmatpush1.msra.mxu0 0.0
    %198 = vmatprep.subr.mxu0 0.0
    %199 = vmatpush1.msra.mxu0 0.0
    %200 = vmatprep.subr.mxu0 0.0
    %201 = vmatpush1.msra.mxu0 0.0
    %202 = vmatprep.subr.mxu0 0.0
    %203 = vmatpush1.msra.mxu0 0.0
    %204 = vmatprep.subr.mxu0 0.0
    %205 = vmatpush1.msra.mxu0 0.0
    %206 = vmatprep.subr.mxu0 0.0
    %207 = vmatpush1.msra.mxu0 0.0
    %208 = vmatprep.subr.mxu0 0.0
    %209 = vmatpush1.msra.mxu0 0.0
    %210 = vmatprep.subr.mxu0 0.0
    %211 = vmatpush1.msra.mxu0 0.0
    %212 = vmatprep.subr.mxu0 0.0
    %213 = vmatpush1.msra.mxu0 0.0
    %214 = vmatprep.subr.mxu0 0.0
    %215 = vmatpush1.msra.mxu0 0.0
    %216 = vmatprep.subr.mxu0 0.0
    %217 = vmatpush1.msra.mxu0 0.0
    %218 = vmatprep.mubr.f32.mxu0 0.0
    %219 = vmatmul.mubr.f32.gmra.mrb[0].mxu0 %v152
    %v220 = vpop.f32.mrb[0].mxu0
    %v221 = vadd.f32 %v108, %v220
    %v222 = vpop.f32.mrb[0].mxu0
    %223 = vdwg.mxu0
    %224 = vmatprep.subr.mxu0 0.0
    %225 = vmatpush1.msra.mxu0 %v32
    %226 = vmatprep.subr.mxu0 0.0
    %227 = vmatpush1.msra.mxu0 %v33
    %228 = vmatprep.subr.mxu0 0.0
    %229 = vmatpush1.msra.mxu0 %v34
    %230 = vmatprep.subr.mxu0 0.0
    %231 = vmatpush1.msra.mxu0 %v35
    %232 = vmatprep.subr.mxu0 0.0
    %233 = vmatpush1.msra.mxu0 %v36
    %234 = vmatprep.subr.mxu0 0.0
    %235 = vmatpush1.msra.mxu0 %v37
    %236 = vmatprep.subr.mxu0 0.0
    %237 = vmatpush1.msra.mxu0 0.0
    %238 = vmatprep.subr.mxu0 0.0
    %239 = vmatpush1.msra.mxu0 0.0
    %240 = vmatprep.subr.mxu0 0.0
    %241 = vmatpush1.msra.mxu0 0.0
    %242 = vmatprep.subr.mxu0 0.0
    %243 = vmatpush1.msra.mxu0 0.0
    %244 = vmatprep.subr.mxu0 0.0
    %245 = vmatpush1.msra.mxu0 0.0
    %246 = vmatprep.subr.mxu0 0.0
    %247 = vmatpush1.msra.mxu0 0.0
    %248 = vmatprep.subr.mxu0 0.0
    %249 = vmatpush1.msra.mxu0 0.0
    %250 = vmatprep.subr.mxu0 0.0
    %251 = vmatpush1.msra.mxu0 0.0
    %252 = vmatprep.subr.mxu0 0.0
    %253 = vmatpush1.msra.mxu0 0.0
    %254 = vmatprep.subr.mxu0 0.0
    %255 = vmatpush1.msra.mxu0 0.0
    %256 = vmatprep.subr.mxu0 0.0
    %257 = vmatpush1.msra.mxu0 0.0
    %258 = vmatprep.subr.mxu0 0.0
    %259 = vmatpush1.msra.mxu0 0.0
    %260 = vmatprep.subr.mxu0 0.0
    %261 = vmatpush1.msra.mxu0 0.0
    %262 = vmatprep.subr.mxu0 0.0
    %263 = vmatpush1.msra.mxu0 0.0
    %264 = vmatprep.subr.mxu0 0.0
    %265 = vmatpush1.msra.mxu0 0.0
    %266 = vmatprep.subr.mxu0 0.0
    %267 = vmatpush1.msra.mxu0 0.0
    %268 = vmatprep.subr.mxu0 0.0
    %269 = vmatpush1.msra.mxu0 0.0
    %270 = vmatprep.subr.mxu0 0.0
    %271 = vmatpush1.msra.mxu0 0.0
    %272 = vmatprep.subr.mxu0 0.0
    %273 = vmatpush1.msra.mxu0 0.0
    %274 = vmatprep.subr.mxu0 0.0
    %275 = vmatpush1.msra.mxu0 0.0
    %276 = vmatprep.subr.mxu0 0.0
    %277 = vmatpush1.msra.mxu0 0.0
    %278 = vmatprep.subr.mxu0 0.0
    %279 = vmatpush1.msra.mxu0 0.0
    %280 = vmatprep.subr.mxu0 0.0
    %281 = vmatpush1.msra.mxu0 0.0
    %282 = vmatprep.subr.mxu0 0.0
    %283 = vmatpush1.msra.mxu0 0.0
    %284 = vmatprep.subr.mxu0 0.0
    %285 = vmatpush1.msra.mxu0 0.0
    %286 = vmatprep.subr.mxu0 0.0
    %287 = vmatpush1.msra.mxu0 0.0
    %288 = vmatprep.mubr.f32.mxu0 0.0
    %289 = vmatmul.mubr.f32.gmra.mrb[0].mxu0 %v152
    %v290 = vpop.f32.mrb[0].mxu0
    %v291 = vadd.f32 %v112, %v290
    %v292 = vpop.f32.mrb[0].mxu0
    %293 = vdwg.mxu0
    %294 = vmatprep.subr.mxu0 0.0
    %295 = vmatpush1.msra.mxu0 %v38
    %296 = vmatprep.subr.mxu0 0.0
    %297 = vmatpush1.msra.mxu0 %v39
    %298 = vmatprep.subr.mxu0 0.0
    %299 = vmatpush1.msra.mxu0 %v40
    %300 = vmatprep.subr.mxu0 0.0
    %301 = vmatpush1.msra.mxu0 %v41
    %302 = vmatprep.subr.mxu0 0.0
    %303 = vmatpush1.msra.mxu0 %v42
    %304 = vmatprep.subr.mxu0 0.0
    %305 = vmatpush1.msra.mxu0 %v43
    %306 = vmatprep.subr.mxu0 0.0
    %307 = vmatpush1.msra.mxu0 0.0
    %308 = vmatprep.subr.mxu0 0.0
    %309 = vmatpush1.msra.mxu0 0.0
    %310 = vmatprep.subr.mxu0 0.0
    %311 = vmatpush1.msra.mxu0 0.0
    %312 = vmatprep.subr.mxu0 0.0
    %313 = vmatpush1.msra.mxu0 0.0
    %314 = vmatprep.subr.mxu0 0.0
    %315 = vmatpush1.msra.mxu0 0.0
    %316 = vmatprep.subr.mxu0 0.0
    %317 = vmatpush1.msra.mxu0 0.0
    %318 = vmatprep.subr.mxu0 0.0
    %319 = vmatpush1.msra.mxu0 0.0
    %320 = vmatprep.subr.mxu0 0.0
    %321 = vmatpush1.msra.mxu0 0.0
    %322 = vmatprep.subr.mxu0 0.0
    %323 = vmatpush1.msra.mxu0 0.0
    %324 = vmatprep.subr.mxu0 0.0
    %325 = vmatpush1.msra.mxu0 0.0
    %326 = vmatprep.subr.mxu0 0.0
    %327 = vmatpush1.msra.mxu0 0.0
    %328 = vmatprep.subr.mxu0 0.0
    %329 = vmatpush1.msra.mxu0 0.0
    %330 = vmatprep.subr.mxu0 0.0
    %331 = vmatpush1.msra.mxu0 0.0
    %332 = vmatprep.subr.mxu0 0.0
    %333 = vmatpush1.msra.mxu0 0.0
    %334 = vmatprep.subr.mxu0 0.0
    %335 = vmatpush1.msra.mxu0 0.0
    %336 = vmatprep.subr.mxu0 0.0
    %337 = vmatpush1.msra.mxu0 0.0
    %338 = vmatprep.subr.mxu0 0.0
    %339 = vmatpush1.msra.mxu0 0.0
    %340 = vmatprep.subr.mxu0 0.0
    %341 = vmatpush1.msra.mxu0 0.0
    %342 = vmatprep.subr.mxu0 0.0
    %343 = vmatpush1.msra.mxu0 0.0
    %344 = vmatprep.subr.mxu0 0.0
    %345 = vmatpush1.msra.mxu0 0.0
    %346 = vmatprep.subr.mxu0 0.0
    %347 = vmatpush1.msra.mxu0 0.0
    %348 = vmatprep.subr.mxu0 0.0
    %349 = vmatpush1.msra.mxu0 0.0
    %350 = vmatprep.subr.mxu0 0.0
    %351 = vmatpush1.msra.mxu0 0.0
    %352 = vmatprep.subr.mxu0 0.0
    %353 = vmatpush1.msra.mxu0 0.0
    %354 = vmatprep.subr.mxu0 0.0
    %355 = vmatpush1.msra.mxu0 0.0
    %356 = vmatprep.subr.mxu0 0.0
    %357 = vmatpush1.msra.mxu0 0.0
    %358 = vmatprep.mubr.f32.mxu0 0.0
    %359 = vmatmul.mubr.f32.gmra.mrb[0].mxu0 %v152
    %v360 = vpop.f32.mrb[0].mxu0
    %v361 = vadd.f32 %v116, %v360
    %v362 = vpop.f32.mrb[0].mxu0
    %363 = vdwg.mxu0
    %364 = vmatprep.subr.mxu0 0.0
    %365 = vmatpush1.msra.mxu0 %v44
    %366 = vmatprep.subr.mxu0 0.0
    %367 = vmatpush1.msra.mxu0 %v45
    %368 = vmatprep.subr.mxu0 0.0
    %369 = vmatpush1.msra.mxu0 %v46
    %370 = vmatprep.subr.mxu0 0.0
    %371 = vmatpush1.msra.mxu0 %v47
    %372 = vmatprep.subr.mxu0 0.0
    %373 = vmatpush1.msra.mxu0 %v48
    %374 = vmatprep.subr.mxu0 0.0
    %375 = vmatpush1.msra.mxu0 %v49
    %376 = vmatprep.subr.mxu0 0.0
    %377 = vmatpush1.msra.mxu0 0.0
    %378 = vmatprep.subr.mxu0 0.0
    %379 = vmatpush1.msra.mxu0 0.0
    %380 = vmatprep.subr.mxu0 0.0
    %381 = vmatpush1.msra.mxu0 0.0
    %382 = vmatprep.subr.mxu0 0.0
    %383 = vmatpush1.msra.mxu0 0.0
    %384 = vmatprep.subr.mxu0 0.0
    %385 = vmatpush1.msra.mxu0 0.0
    %386 = vmatprep.subr.mxu0 0.0
    %387 = vmatpush1.msra.mxu0 0.0
    %388 = vmatprep.subr.mxu0 0.0
    %389 = vmatpush1.msra.mxu0 0.0
    %390 = vmatprep.subr.mxu0 0.0
    %391 = vmatpush1.msra.mxu0 0.0
    %392 = vmatprep.subr.mxu0 0.0
    %393 = vmatpush1.msra.mxu0 0.0
    %394 = vmatprep.subr.mxu0 0.0
    %395 = vmatpush1.msra.mxu0 0.0
    %396 = vmatprep.subr.mxu0 0.0
    %397 = vmatpush1.msra.mxu0 0.0
    %398 = vmatprep.subr.mxu0 0.0
    %399 = vmatpush1.msra.mxu0 0.0
    %400 = vmatprep.subr.mxu0 0.0
    %401 = vmatpush1.msra.mxu0 0.0
    %402 = vmatprep.subr.mxu0 0.0
    %403 = vmatpush1.msra.mxu0 0.0
    %404 = vmatprep.subr.mxu0 0.0
    %405 = vmatpush1.msra.mxu0 0.0
    %406 = vmatprep.subr.mxu0 0.0
    %407 = vmatpush1.msra.mxu0 0.0
    %408 = vmatprep.subr.mxu0 0.0
    %409 = vmatpush1.msra.mxu0 0.0
    %410 = vmatprep.subr.mxu0 0.0
    %411 = vmatpush1.msra.mxu0 0.0
    %412 = vmatprep.subr.mxu0 0.0
    %413 = vmatpush1.msra.mxu0 0.0
    %414 = vmatprep.subr.mxu0 0.0
    %415 = vmatpush1.msra.mxu0 0.0
    %416 = vmatprep.subr.mxu0 0.0
    %417 = vmatpush1.msra.mxu0 0.0
    %418 = vmatprep.subr.mxu0 0.0
    %419 = vmatpush1.msra.mxu0 0.0
    %420 = vmatprep.subr.mxu0 0.0
    %421 = vmatpush1.msra.mxu0 0.0
    %422 = vmatprep.subr.mxu0 0.0
    %423 = vmatpush1.msra.mxu0 0.0
    %424 = vmatprep.subr.mxu0 0.0
    %425 = vmatpush1.msra.mxu0 0.0
    %426 = vmatprep.subr.mxu0 0.0
    %427 = vmatpush1.msra.mxu0 0.0
    %428 = vmatprep.mubr.f32.mxu0 0.0
    %429 = vmatmul.mubr.f32.gmra.mrb[0].mxu0 %v152
    %v430 = vpop.f32.mrb[0].mxu0
    %v431 = vadd.f32 %v120, %v430
    %v432 = vpop.f32.mrb[0].mxu0
    %433 = vdwg.mxu0
    %434 = vmatprep.subr.mxu0 0.0
    %435 = vmatpush1.msra.mxu0 %v50
    %436 = vmatprep.subr.mxu0 0.0
    %437 = vmatpush1.msra.mxu0 %v51
    %438 = vmatprep.subr.mxu0 0.0
    %439 = vmatpush1.msra.mxu0 %v52
    %440 = vmatprep.subr.mxu0 0.0
    %441 = vmatpush1.msra.mxu0 %v53
    %442 = vmatprep.subr.mxu0 0.0
    %443 = vmatpush1.msra.mxu0 %v54
    %444 = vmatprep.subr.mxu0 0.0
    %445 = vmatpush1.msra.mxu0 %v55
    %446 = vmatprep.subr.mxu0 0.0
    %447 = vmatpush1.msra.mxu0 0.0
    %448 = vmatprep.subr.mxu0 0.0
    %449 = vmatpush1.msra.mxu0 0.0
    %450 = vmatprep.subr.mxu0 0.0
    %451 = vmatpush1.msra.mxu0 0.0
    %452 = vmatprep.subr.mxu0 0.0
    %453 = vmatpush1.msra.mxu0 0.0
    %454 = vmatprep.subr.mxu0 0.0
    %455 = vmatpush1.msra.mxu0 0.0
    %456 = vmatprep.subr.mxu0 0.0
    %457 = vmatpush1.msra.mxu0 0.0
    %458 = vmatprep.subr.mxu0 0.0
    %459 = vmatpush1.msra.mxu0 0.0
    %460 = vmatprep.subr.mxu0 0.0
    %461 = vmatpush1.msra.mxu0 0.0
    %462 = vmatprep.subr.mxu0 0.0
    %463 = vmatpush1.msra.mxu0 0.0
    %464 = vmatprep.subr.mxu0 0.0
    %465 = vmatpush1.msra.mxu0 0.0
    %466 = vmatprep.subr.mxu0 0.0
    %467 = vmatpush1.msra.mxu0 0.0
    %468 = vmatprep.subr.mxu0 0.0
    %469 = vmatpush1.msra.mxu0 0.0
    %470 = vmatprep.subr.mxu0 0.0
    %471 = vmatpush1.msra.mxu0 0.0
    %472 = vmatprep.subr.mxu0 0.0
    %473 = vmatpush1.msra.mxu0 0.0
    %474 = vmatprep.subr.mxu0 0.0
    %475 = vmatpush1.msra.mxu0 0.0
    %476 = vmatprep.subr.mxu0 0.0
    %477 = vmatpush1.msra.mxu0 0.0
    %478 = vmatprep.subr.mxu0 0.0
    %479 = vmatpush1.msra.mxu0 0.0
    %480 = vmatprep.subr.mxu0 0.0
    %481 = vmatpush1.msra.mxu0 0.0
    %482 = vmatprep.subr.mxu0 0.0
    %483 = vmatpush1.msra.mxu0 0.0
    %484 = vmatprep.subr.mxu0 0.0
    %485 = vmatpush1.msra.mxu0 0.0
    %486 = vmatprep.subr.mxu0 0.0
    %487 = vmatpush1.msra.mxu0 0.0
    %488 = vmatprep.subr.mxu0 0.0
    %489 = vmatpush1.msra.mxu0 0.0
    %490 = vmatprep.subr.mxu0 0.0
    %491 = vmatpush1.msra.mxu0 0.0
    %492 = vmatprep.subr.mxu0 0.0
    %493 = vmatpush1.msra.mxu0 0.0
    %494 = vmatprep.subr.mxu0 0.0
    %495 = vmatpush1.msra.mxu0 0.0
    %496 = vmatprep.subr.mxu0 0.0
    %497 = vmatpush1.msra.mxu0 0.0
    %498 = vmatprep.mubr.f32.mxu0 0.0
    %499 = vmatmul.mubr.f32.gmra.mrb[0].mxu0 %v152
    %v500 = vpop.f32.mrb[0].mxu0
    %v501 = vadd.f32 %v124, %v500
    %v502 = vpop.f32.mrb[0].mxu0
    %503 = vdwg.mxu0
    %504 = vmatprep.subr.mxu0 0.0
    %505 = vmatpush1.msra.mxu0 %v56
    %506 = vmatprep.subr.mxu0 0.0
    %507 = vmatpush1.msra.mxu0 %v57
    %508 = vmatprep.subr.mxu0 0.0
    %509 = vmatpush1.msra.mxu0 %v58
    %510 = vmatprep.subr.mxu0 0.0
    %511 = vmatpush1.msra.mxu0 %v59
    %512 = vmatprep.subr.mxu0 0.0
    %513 = vmatpush1.msra.mxu0 %v60
    %514 = vmatprep.subr.mxu0 0.0
    %515 = vmatpush1.msra.mxu0 %v61
    %516 = vmatprep.subr.mxu0 0.0
    %517 = vmatpush1.msra.mxu0 0.0
    %518 = vmatprep.subr.mxu0 0.0
    %519 = vmatpush1.msra.mxu0 0.0
    %520 = vmatprep.subr.mxu0 0.0
    %521 = vmatpush1.msra.mxu0 0.0
    %522 = vmatprep.subr.mxu0 0.0
    %523 = vmatpush1.msra.mxu0 0.0
    %524 = vmatprep.subr.mxu0 0.0
    %525 = vmatpush1.msra.mxu0 0.0
    %526 = vmatprep.subr.mxu0 0.0
    %527 = vmatpush1.msra.mxu0 0.0
    %528 = vmatprep.subr.mxu0 0.0
    %529 = vmatpush1.msra.mxu0 0.0
    %530 = vmatprep.subr.mxu0 0.0
    %531 = vmatpush1.msra.mxu0 0.0
    %532 = vmatprep.subr.mxu0 0.0
    %533 = vmatpush1.msra.mxu0 0.0
    %534 = vmatprep.subr.mxu0 0.0
    %535 = vmatpush1.msra.mxu0 0.0
    %536 = vmatprep.subr.mxu0 0.0
    %537 = vmatpush1.msra.mxu0 0.0
    %538 = vmatprep.subr.mxu0 0.0
    %539 = vmatpush1.msra.mxu0 0.0
    %540 = vmatprep.subr.mxu0 0.0
    %541 = vmatpush1.msra.mxu0 0.0
    %542 = vmatprep.subr.mxu0 0.0
    %543 = vmatpush1.msra.mxu0 0.0
    %544 = vmatprep.subr.mxu0 0.0
    %545 = vmatpush1.msra.mxu0 0.0
    %546 = vmatprep.subr.mxu0 0.0
    %547 = vmatpush1.msra.mxu0 0.0
    %548 = vmatprep.subr.mxu0 0.0
    %549 = vmatpush1.msra.mxu0 0.0
    %550 = vmatprep.subr.mxu0 0.0
    %551 = vmatpush1.msra.mxu0 0.0
    %552 = vmatprep.subr.mxu0 0.0
    %553 = vmatpush1.msra.mxu0 0.0
    %554 = vmatprep.subr.mxu0 0.0
    %555 = vmatpush1.msra.mxu0 0.0
    %556 = vmatprep.subr.mxu0 0.0
    %557 = vmatpush1.msra.mxu0 0.0
    %558 = vmatprep.subr.mxu0 0.0
    %559 = vmatpush1.msra.mxu0 0.0
    %560 = vmatprep.subr.mxu0 0.0
    %561 = vmatpush1.msra.mxu0 0.0
    %562 = vmatprep.subr.mxu0 0.0
    %563 = vmatpush1.msra.mxu0 0.0
    %564 = vmatprep.subr.mxu0 0.0
    %565 = vmatpush1.msra.mxu0 0.0
    %566 = vmatprep.subr.mxu0 0.0
    %567 = vmatpush1.msra.mxu0 0.0
    %568 = vmatprep.mubr.f32.mxu0 0.0
    %569 = vmatmul.mubr.f32.gmra.mrb[0].mxu0 %v152
    %v570 = vpop.f32.mrb[0].mxu0
    %v571 = vadd.f32 %v128, %v570
    %v572 = vpop.f32.mrb[0].mxu0
    %573 = vdwg.mxu0
    %574 = vmatprep.subr.mxu0 0.0
    %575 = vmatpush1.msra.mxu0 %v62
    %576 = vmatprep.subr.mxu0 0.0
    %577 = vmatpush1.msra.mxu0 %v63
    %578 = vmatprep.subr.mxu0 0.0
    %579 = vmatpush1.msra.mxu0 %v64
    %580 = vmatprep.subr.mxu0 0.0
    %581 = vmatpush1.msra.mxu0 %v65
    %582 = vmatprep.subr.mxu0 0.0
    %583 = vmatpush1.msra.mxu0 %v66
    %584 = vmatprep.subr.mxu0 0.0
    %585 = vmatpush1.msra.mxu0 %v67
    %586 = vmatprep.subr.mxu0 0.0
    %587 = vmatpush1.msra.mxu0 0.0
    %588 = vmatprep.subr.mxu0 0.0
    %589 = vmatpush1.msra.mxu0 0.0
    %590 = vmatprep.subr.mxu0 0.0
    %591 = vmatpush1.msra.mxu0 0.0
    %592 = vmatprep.subr.mxu0 0.0
    %593 = vmatpush1.msra.mxu0 0.0
    %594 = vmatprep.subr.mxu0 0.0
    %595 = vmatpush1.msra.mxu0 0.0
    %596 = vmatprep.subr.mxu0 0.0
    %597 = vmatpush1.msra.mxu0 0.0
    %598 = vmatprep.subr.mxu0 0.0
    %599 = vmatpush1.msra.mxu0 0.0
    %600 = vmatprep.subr.mxu0 0.0
    %601 = vmatpush1.msra.mxu0 0.0
    %602 = vmatprep.subr.mxu0 0.0
    %603 = vmatpush1.msra.mxu0 0.0
    %604 = vmatprep.subr.mxu0 0.0
    %605 = vmatpush1.msra.mxu0 0.0
    %606 = vmatprep.subr.mxu0 0.0
    %607 = vmatpush1.msra.mxu0 0.0
    %608 = vmatprep.subr.mxu0 0.0
    %609 = vmatpush1.msra.mxu0 0.0
    %610 = vmatprep.subr.mxu0 0.0
    %611 = vmatpush1.msra.mxu0 0.0
    %612 = vmatprep.subr.mxu0 0.0
    %613 = vmatpush1.msra.mxu0 0.0
    %614 = vmatprep.subr.mxu0 0.0
    %615 = vmatpush1.msra.mxu0 0.0
    %616 = vmatprep.subr.mxu0 0.0
    %617 = vmatpush1.msra.mxu0 0.0
    %618 = vmatprep.subr.mxu0 0.0
    %619 = vmatpush1.msra.mxu0 0.0
    %620 = vmatprep.subr.mxu0 0.0
    %621 = vmatpush1.msra.mxu0 0.0
    %622 = vmatprep.subr.mxu0 0.0
    %623 = vmatpush1.msra.mxu0 0.0
    %624 = vmatprep.subr.mxu0 0.0
    %625 = vmatpush1.msra.mxu0 0.0
    %626 = vmatprep.subr.mxu0 0.0
    %627 = vmatpush1.msra.mxu0 0.0
    %628 = vmatprep.subr.mxu0 0.0
    %629 = vmatpush1.msra.mxu0 0.0
    %630 = vmatprep.subr.mxu0 0.0
    %631 = vmatpush1.msra.mxu0 0.0
    %632 = vmatprep.subr.mxu0 0.0
    %633 = vmatpush1.msra.mxu0 0.0
    %634 = vmatprep.subr.mxu0 0.0
    %635 = vmatpush1.msra.mxu0 0.0
    %636 = vmatprep.subr.mxu0 0.0
    %637 = vmatpush1.msra.mxu0 0.0
    %638 = vmatprep.mubr.f32.mxu0 0.0
    %639 = vmatmul.mubr.f32.gmra.mrb[0].mxu0 %v152
    %v640 = vpop.f32.mrb[0].mxu0
    %v641 = vadd.f32 %v132, %v640
    %v642 = vpop.f32.mrb[0].mxu0
    %643 = vdwg.mxu0
    %644 = vmatprep.subr.mxu0 0.0
    %645 = vmatpush1.msra.mxu0 %v68
    %646 = vmatprep.subr.mxu0 0.0
    %647 = vmatpush1.msra.mxu0 %v69
    %648 = vmatprep.subr.mxu0 0.0
    %649 = vmatpush1.msra.mxu0 %v70
    %650 = vmatprep.subr.mxu0 0.0
    %651 = vmatpush1.msra.mxu0 %v71
    %652 = vmatprep.subr.mxu0 0.0
    %653 = vmatpush1.msra.mxu0 %v72
    %654 = vmatprep.subr.mxu0 0.0
    %655 = vmatpush1.msra.mxu0 %v73
    %656 = vmatprep.subr.mxu0 0.0
    %657 = vmatpush1.msra.mxu0 0.0
    %658 = vmatprep.subr.mxu0 0.0
    %659 = vmatpush1.msra.mxu0 0.0
    %660 = vmatprep.subr.mxu0 0.0
    %661 = vmatpush1.msra.mxu0 0.0
    %662 = vmatprep.subr.mxu0 0.0
    %663 = vmatpush1.msra.mxu0 0.0
    %664 = vmatprep.subr.mxu0 0.0
    %665 = vmatpush1.msra.mxu0 0.0
    %666 = vmatprep.subr.mxu0 0.0
    %667 = vmatpush1.msra.mxu0 0.0
    %668 = vmatprep.subr.mxu0 0.0
    %669 = vmatpush1.msra.mxu0 0.0
    %670 = vmatprep.subr.mxu0 0.0
    %671 = vmatpush1.msra.mxu0 0.0
    %672 = vmatprep.subr.mxu0 0.0
    %673 = vmatpush1.msra.mxu0 0.0
    %674 = vmatprep.subr.mxu0 0.0
    %675 = vmatpush1.msra.mxu0 0.0
    %676 = vmatprep.subr.mxu0 0.0
    %677 = vmatpush1.msra.mxu0 0.0
    %678 = vmatprep.subr.mxu0 0.0
    %679 = vmatpush1.msra.mxu0 0.0
    %680 = vmatprep.subr.mxu0 0.0
    %681 = vmatpush1.msra.mxu0 0.0
    %682 = vmatprep.subr.mxu0 0.0
    %683 = vmatpush1.msra.mxu0 0.0
    %684 = vmatprep.subr.mxu0 0.0
    %685 = vmatpush1.msra.mxu0 0.0
    %686 = vmatprep.subr.mxu0 0.0
    %687 = vmatpush1.msra.mxu0 0.0
    %688 = vmatprep.subr.mxu0 0.0
    %689 = vmatpush1.msra.mxu0 0.0
    %690 = vmatprep.subr.mxu0 0.0
    %691 = vmatpush1.msra.mxu0 0.0
    %692 = vmatprep.subr.mxu0 0.0
    %693 = vmatpush1.msra.mxu0 0.0
    %694 = vmatprep.subr.mxu0 0.0
    %695 = vmatpush1.msra.mxu0 0.0
    %696 = vmatprep.subr.mxu0 0.0
    %697 = vmatpush1.msra.mxu0 0.0
    %698 = vmatprep.subr.mxu0 0.0
    %699 = vmatpush1.msra.mxu0 0.0
    %700 = vmatprep.subr.mxu0 0.0
    %701 = vmatpush1.msra.mxu0 0.0
    %702 = vmatprep.subr.mxu0 0.0
    %703 = vmatpush1.msra.mxu0 0.0
    %704 = vmatprep.subr.mxu0 0.0
    %705 = vmatpush1.msra.mxu0 0.0
    %706 = vmatprep.subr.mxu0 0.0
    %707 = vmatpush1.msra.mxu0 0.0
    %708 = vmatprep.mubr.f32.mxu0 0.0
    %709 = vmatmul.mubr.f32.gmra.mrb[0].mxu0 %v152
    %v710 = vpop.f32.mrb[0].mxu0
    %v711 = vadd.f32 %v136, %v710
    %v712 = vpop.f32.mrb[0].mxu0
    %713 = vdwg.mxu0
    %714 = vmatprep.subr.mxu0 0.0
    %715 = vmatpush1.msra.mxu0 %v74
    %716 = vmatprep.subr.mxu0 0.0
    %717 = vmatpush1.msra.mxu0 %v75
    %718 = vmatprep.subr.mxu0 0.0
    %719 = vmatpush1.msra.mxu0 %v76
    %720 = vmatprep.subr.mxu0 0.0
    %721 = vmatpush1.msra.mxu0 %v77
    %722 = vmatprep.subr.mxu0 0.0
    %723 = vmatpush1.msra.mxu0 %v78
    %724 = vmatprep.subr.mxu0 0.0
    %725 = vmatpush1.msra.mxu0 %v79
    %726 = vmatprep.subr.mxu0 0.0
    %727 = vmatpush1.msra.mxu0 0.0
    %728 = vmatprep.subr.mxu0 0.0
    %729 = vmatpush1.msra.mxu0 0.0
    %730 = vmatprep.subr.mxu0 0.0
    %731 = vmatpush1.msra.mxu0 0.0
    %732 = vmatprep.subr.mxu0 0.0
    %733 = vmatpush1.msra.mxu0 0.0
    %734 = vmatprep.subr.mxu0 0.0
    %735 = vmatpush1.msra.mxu0 0.0
    %736 = vmatprep.subr.mxu0 0.0
    %737 = vmatpush1.msra.mxu0 0.0
    %738 = vmatprep.subr.mxu0 0.0
    %739 = vmatpush1.msra.mxu0 0.0
    %740 = vmatprep.subr.mxu0 0.0
    %741 = vmatpush1.msra.mxu0 0.0
    %742 = vmatprep.subr.mxu0 0.0
    %743 = vmatpush1.msra.mxu0 0.0
    %744 = vmatprep.subr.mxu0 0.0
    %745 = vmatpush1.msra.mxu0 0.0
    %746 = vmatprep.subr.mxu0 0.0
    %747 = vmatpush1.msra.mxu0 0.0
    %748 = vmatprep.subr.mxu0 0.0
    %749 = vmatpush1.msra.mxu0 0.0
    %750 = vmatprep.subr.mxu0 0.0
    %751 = vmatpush1.msra.mxu0 0.0
    %752 = vmatprep.subr.mxu0 0.0
    %753 = vmatpush1.msra.mxu0 0.0
    %754 = vmatprep.subr.mxu0 0.0
    %755 = vmatpush1.msra.mxu0 0.0
    %756 = vmatprep.subr.mxu0 0.0
    %757 = vmatpush1.msra.mxu0 0.0
    %758 = vmatprep.subr.mxu0 0.0
    %759 = vmatpush1.msra.mxu0 0.0
    %760 = vmatprep.subr.mxu0 0.0
    %761 = vmatpush1.msra.mxu0 0.0
    %762 = vmatprep.subr.mxu0 0.0
    %763 = vmatpush1.msra.mxu0 0.0
    %764 = vmatprep.subr.mxu0 0.0
    %765 = vmatpush1.msra.mxu0 0.0
    %766 = vmatprep.subr.mxu0 0.0
    %767 = vmatpush1.msra.mxu0 0.0
    %768 = vmatprep.subr.mxu0 0.0
    %769 = vmatpush1.msra.mxu0 0.0
    %770 = vmatprep.subr.mxu0 0.0
    %771 = vmatpush1.msra.mxu0 0.0
    %772 = vmatprep.subr.mxu0 0.0
    %773 = vmatpush1.msra.mxu0 0.0
    %774 = vmatprep.subr.mxu0 0.0
    %775 = vmatpush1.msra.mxu0 0.0
    %776 = vmatprep.subr.mxu0 0.0
    %777 = vmatpush1.msra.mxu0 0.0
    %778 = vmatprep.mubr.f32.mxu0 0.0
    %779 = vmatmul.mubr.f32.gmra.mrb[0].mxu0 %v152
    %v780 = vpop.f32.mrb[0].mxu0
    %v781 = vadd.f32 %v140, %v780
    %v782 = vpop.f32.mrb[0].mxu0
    %783 = vdwg.mxu0
    %vm784 = vcmask 130048
    %v786 = vsel %vm784, %v221, 0
    %v789 = vsel %vm784, %v431, 0
    %791 = vmatprep.subr.mxu0 0.0
    %792 = vmatpush1.xpose.msra.mxu0 %v789
    %793 = vmatprep.subr.mxu0 0.0
    %794 = vmatpush1.xpose.msra.mxu0 0.0
    %795 = vmatprep.subr.mxu0 0.0
    %796 = vmatpush1.xpose.msra.mxu0 0.0
    %797 = vmatprep.subr.mxu0 0.0
    %798 = vmatpush1.xpose.msra.mxu0 0.0
    %799 = vmatprep.subr.mxu0 0.0
    %800 = vmatpush1.xpose.msra.mxu0 0.0
    %801 = vmatprep.subr.mxu0 0.0
    %802 = vmatpush1.xpose.msra.mxu0 0.0
    %803 = vmatprep.subr.mxu0 0.0
    %804 = vmatpush1.xpose.msra.mxu0 0.0
    %805 = vmatprep.subr.mxu0 0.0
    %806 = vmatpush1.xpose.msra.mxu0 0.0
    %807 = vmatprep.subr.mxu0 0.0
    %808 = vmatpush1.xpose.msra.mxu0 0.0
    %809 = vmatprep.subr.mxu0 0.0
    %810 = vmatpush1.xpose.msra.mxu0 0.0
    %811 = vmatprep.subr.mxu0 0.0
    %812 = vmatpush1.xpose.msra.mxu0 0.0
    %813 = vmatprep.subr.mxu0 0.0
    %814 = vmatpush1.xpose.msra.mxu0 0.0
    %815 = vmatprep.subr.mxu0 0.0
    %816 = vmatpush1.xpose.msra.mxu0 0.0
    %817 = vmatprep.subr.mxu0 0.0
    %818 = vmatpush1.xpose.msra.mxu0 0.0
    %819 = vmatprep.subr.mxu0 0.0
    %820 = vmatpush1.xpose.msra.mxu0 0.0
    %821 = vmatprep.subr.mxu0 0.0
    %822 = vmatpush1.xpose.msra.mxu0 0.0
    %823 = vmatprep.subr.mxu0 0.0
    %824 = vmatpush1.xpose.msra.mxu0 0.0
    %825 = vmatprep.subr.mxu0 0.0
    %826 = vmatpush1.xpose.msra.mxu0 0.0
    %827 = vmatprep.subr.mxu0 0.0
    %828 = vmatpush1.xpose.msra.mxu0 0.0
    %829 = vmatprep.subr.mxu0 0.0
    %830 = vmatpush1.xpose.msra.mxu0 0.0
    %831 = vmatprep.subr.mxu0 0.0
    %832 = vmatpush1.xpose.msra.mxu0 0.0
    %833 = vmatprep.subr.mxu0 0.0
    %834 = vmatpush1.xpose.msra.mxu0 0.0
    %835 = vmatprep.subr.mxu0 0.0
    %836 = vmatpush1.xpose.msra.mxu0 0.0
    %837 = vmatprep.subr.mxu0 0.0
    %838 = vmatpush1.xpose.msra.mxu0 0.0
    %839 = vmatprep.subr.mxu0 0.0
    %840 = vmatpush1.xpose.msra.mxu0 0.0
    %841 = vmatprep.subr.mxu0 0.0
    %842 = vmatpush1.xpose.msra.mxu0 0.0
    %843 = vmatprep.subr.mxu0 0.0
    %844 = vmatpush1.xpose.msra.mxu0 0.0
    %845 = vmatprep.subr.mxu0 0.0
    %846 = vmatpush1.xpose.msra.mxu0 0.0
    %847 = vmatprep.subr.mxu0 0.0
    %848 = vmatpush1.xpose.msra.mxu0 0.0
    %849 = vmatprep.subr.mxu0 0.0
    %850 = vmatpush1.xpose.msra.mxu0 0.0
    %851 = vmatprep.subr.mxu0 0.0
    %852 = vmatpush1.xpose.msra.mxu0 0.0
    %853 = vmatprep.subr.mxu0 0.0
    %854 = vmatpush1.xpose.msra.mxu0 0.0
    %855 = vmatprep.mubr.f32.mxu0 0.0
    %856 = vmatmul.mubr.f32.gmra.mrb[0].mxu0 %v786
    %v857 = vpop.f32.mrb[0].mxu0
    %v858 = vadd.f32 %v25, %v857
    %v859 = vpop.f32.mrb[0].mxu0
    %860 = vdwg.mxu0
    %v862 = vsel %vm784, %v291, 0
    %v865 = vsel %vm784, %v501, 0
    %867 = vmatprep.subr.mxu0 0.0
    %868 = vmatpush1.xpose.msra.mxu0 %v865
    %869 = vmatprep.subr.mxu0 0.0
    %870 = vmatpush1.xpose.msra.mxu0 0.0
    %871 = vmatprep.subr.mxu0 0.0
    %872 = vmatpush1.xpose.msra.mxu0 0.0
    %873 = vmatprep.subr.mxu0 0.0
    %874 = vmatpush1.xpose.msra.mxu0 0.0
    %875 = vmatprep.subr.mxu0 0.0
    %876 = vmatpush1.xpose.msra.mxu0 0.0
    %877 = vmatprep.subr.mxu0 0.0
    %878 = vmatpush1.xpose.msra.mxu0 0.0
    %879 = vmatprep.subr.mxu0 0.0
    %880 = vmatpush1.xpose.msra.mxu0 0.0
    %881 = vmatprep.subr.mxu0 0.0
    %882 = vmatpush1.xpose.msra.mxu0 0.0
    %883 = vmatprep.subr.mxu0 0.0
    %884 = vmatpush1.xpose.msra.mxu0 0.0
    %885 = vmatprep.subr.mxu0 0.0
    %886 = vmatpush1.xpose.msra.mxu0 0.0
    %887 = vmatprep.subr.mxu0 0.0
    %888 = vmatpush1.xpose.msra.mxu0 0.0
    %889 = vmatprep.subr.mxu0 0.0
    %890 = vmatpush1.xpose.msra.mxu0 0.0
    %891 = vmatprep.subr.mxu0 0.0
    %892 = vmatpush1.xpose.msra.mxu0 0.0
    %893 = vmatprep.subr.mxu0 0.0
    %894 = vmatpush1.xpose.msra.mxu0 0.0
    %895 = vmatprep.subr.mxu0 0.0
    %896 = vmatpush1.xpose.msra.mxu0 0.0
    %897 = vmatprep.subr.mxu0 0.0
    %898 = vmatpush1.xpose.msra.mxu0 0.0
    %899 = vmatprep.subr.mxu0 0.0
    %900 = vmatpush1.xpose.msra.mxu0 0.0
    %901 = vmatprep.subr.mxu0 0.0
    %902 = vmatpush1.xpose.msra.mxu0 0.0
    %903 = vmatprep.subr.mxu0 0.0
    %904 = vmatpush1.xpose.msra.mxu0 0.0
    %905 = vmatprep.subr.mxu0 0.0
    %906 = vmatpush1.xpose.msra.mxu0 0.0
    %907 = vmatprep.subr.mxu0 0.0
    %908 = vmatpush1.xpose.msra.mxu0 0.0
    %909 = vmatprep.subr.mxu0 0.0
    %910 = vmatpush1.xpose.msra.mxu0 0.0
    %911 = vmatprep.subr.mxu0 0.0
    %912 = vmatpush1.xpose.msra.mxu0 0.0
    %913 = vmatprep.subr.mxu0 0.0
    %914 = vmatpush1.xpose.msra.mxu0 0.0
    %915 = vmatprep.subr.mxu0 0.0
    %916 = vmatpush1.xpose.msra.mxu0 0.0
    %917 = vmatprep.subr.mxu0 0.0
    %918 = vmatpush1.xpose.msra.mxu0 0.0
    %919 = vmatprep.subr.mxu0 0.0
    %920 = vmatpush1.xpose.msra.mxu0 0.0
    %921 = vmatprep.subr.mxu0 0.0
    %922 = vmatpush1.xpose.msra.mxu0 0.0
    %923 = vmatprep.subr.mxu0 0.0
    %924 = vmatpush1.xpose.msra.mxu0 0.0
    %925 = vmatprep.subr.mxu0 0.0
    %926 = vmatpush1.xpose.msra.mxu0 0.0
    %927 = vmatprep.subr.mxu0 0.0
    %928 = vmatpush1.xpose.msra.mxu0 0.0
    %929 = vmatprep.subr.mxu0 0.0
    %930 = vmatpush1.xpose.msra.mxu0 0.0
    %931 = vmatprep.mubr.f32.mxu0 0.0
    %932 = vmatmul.mubr.f32.gmra.mrb[0].mxu0 %v862
    %v933 = vpop.f32.mrb[0].mxu0
    %v934 = vadd.f32 %v25, %v933
    %v935 = vpop.f32.mrb[0].mxu0
    %936 = vdwg.mxu0
    %v938 = vsel %vm784, %v361, 0
    %v941 = vsel %vm784, %v571, 0
    %943 = vmatprep.subr.mxu0 0.0
    %944 = vmatpush1.xpose.msra.mxu0 %v941
    %945 = vmatprep.subr.mxu0 0.0
    %946 = vmatpush1.xpose.msra.mxu0 0.0
    %947 = vmatprep.subr.mxu0 0.0
    %948 = vmatpush1.xpose.msra.mxu0 0.0
    %949 = vmatprep.subr.mxu0 0.0
    %950 = vmatpush1.xpose.msra.mxu0 0.0
    %951 = vmatprep.subr.mxu0 0.0
    %952 = vmatpush1.xpose.msra.mxu0 0.0
    %953 = vmatprep.subr.mxu0 0.0
    %954 = vmatpush1.xpose.msra.mxu0 0.0
    %955 = vmatprep.subr.mxu0 0.0
    %956 = vmatpush1.xpose.msra.mxu0 0.0
    %957 = vmatprep.subr.mxu0 0.0
    %958 = vmatpush1.xpose.msra.mxu0 0.0
    %959 = vmatprep.subr.mxu0 0.0
    %960 = vmatpush1.xpose.msra.mxu0 0.0
    %961 = vmatprep.subr.mxu0 0.0
    %962 = vmatpush1.xpose.msra.mxu0 0.0
    %963 = vmatprep.subr.mxu0 0.0
    %964 = vmatpush1.xpose.msra.mxu0 0.0
    %965 = vmatprep.subr.mxu0 0.0
    %966 = vmatpush1.xpose.msra.mxu0 0.0
    %967 = vmatprep.subr.mxu0 0.0
    %968 = vmatpush1.xpose.msra.mxu0 0.0
    %969 = vmatprep.subr.mxu0 0.0
    %970 = vmatpush1.xpose.msra.mxu0 0.0
    %971 = vmatprep.subr.mxu0 0.0
    %972 = vmatpush1.xpose.msra.mxu0 0.0
    %973 = vmatprep.subr.mxu0 0.0
    %974 = vmatpush1.xpose.msra.mxu0 0.0
    %975 = vmatprep.subr.mxu0 0.0
    %976 = vmatpush1.xpose.msra.mxu0 0.0
    %977 = vmatprep.subr.mxu0 0.0
    %978 = vmatpush1.xpose.msra.mxu0 0.0
    %979 = vmatprep.subr.mxu0 0.0
    %980 = vmatpush1.xpose.msra.mxu0 0.0
    %981 = vmatprep.subr.mxu0 0.0
    %982 = vmatpush1.xpose.msra.mxu0 0.0
    %983 = vmatprep.subr.mxu0 0.0
    %984 = vmatpush1.xpose.msra.mxu0 0.0
    %985 = vmatprep.subr.mxu0 0.0
    %986 = vmatpush1.xpose.msra.mxu0 0.0
    %987 = vmatprep.subr.mxu0 0.0
    %988 = vmatpush1.xpose.msra.mxu0 0.0
    %989 = vmatprep.subr.mxu0 0.0
    %990 = vmatpush1.xpose.msra.mxu0 0.0
    %991 = vmatprep.subr.mxu0 0.0
    %992 = vmatpush1.xpose.msra.mxu0 0.0
    %993 = vmatprep.subr.mxu0 0.0
    %994 = vmatpush1.xpose.msra.mxu0 0.0
    %995 = vmatprep.subr.mxu0 0.0
    %996 = vmatpush1.xpose.msra.mxu0 0.0
    %997 = vmatprep.subr.mxu0 0.0
    %998 = vmatpush1.xpose.msra.mxu0 0.0
    %999 = vmatprep.subr.mxu0 0.0
    %1000 = vmatpush1.xpose.msra.mxu0 0.0
    %1001 = vmatprep.subr.mxu0 0.0
    %1002 = vmatpush1.xpose.msra.mxu0 0.0
    %1003 = vmatprep.subr.mxu0 0.0
    %1004 = vmatpush1.xpose.msra.mxu0 0.0
    %1005 = vmatprep.subr.mxu0 0.0
    %1006 = vmatpush1.xpose.msra.mxu0 0.0
    %1007 = vmatprep.mubr.f32.mxu0 0.0
    %1008 = vmatmul.mubr.f32.gmra.mrb[0].mxu0 %v938
    %v1009 = vpop.f32.mrb[0].mxu0
    %v1010 = vadd.f32 %v25, %v1009
    %v1011 = vpop.f32.mrb[0].mxu0
    %1012 = vdwg.mxu0
    %vm1013 = vcmask 64512
    %v1014 = vsel %vm1013, %v858, -inf
    %1015 = vmax.xlane.f32.xlu0 %v1014
    %v1016 = vpop.xlane.xlu0 %1015
    %v1017 = vsel %vm1013, %v934, -inf
    %1018 = vmax.xlane.f32.xlu0 %v1017
    %v1019 = vpop.xlane.xlu0 %1018
    %v1020 = vsel %vm1013, %v1010, -inf
    %1021 = vmax.xlane.f32.xlu0 %v1020
    %v1022 = vpop.xlane.xlu0 %1021
    %v1023 = vsub.f32 %v858, %v1016
    %v1024 = vsub.f32 %v934, %v1019
    %v1025 = vsub.f32 %v1010, %v1022
    %v1026 = vmul.f32 %v1023, 1.442695
    %v1027 = vpow.pop %v1026
    %v1028 = vmul.f32 %v1024, 1.442695
    %v1029 = vpow.pop %v1028
    %v1030 = vmul.f32 %v1025, 1.442695
    %v1031 = vpow.pop %v1030
    %v1032 = vsel %vm1013, %v1027, 0.0
    %1033 = vadd.xlane.f32.xlu0 %v1032
    %v1034 = vpop.xlane.xlu0 %1033
    %v1035 = vsel %vm1013, %v1029, 0.0
    %1036 = vadd.xlane.f32.xlu0 %v1035
    %v1037 = vpop.xlane.xlu0 %1036
    %v1038 = vsel %vm1013, %v1031, 0.0
    %1039 = vadd.xlane.f32.xlu0 %v1038
    %v1040 = vpop.xlane.xlu0 %1039
    %v1041 = vrcp.pop %v1034
    %v1042 = vrcp.pop %v1037
    %v1043 = vrcp.pop %v1040
    %v1044 = vmul.f32 %v1027, %v1041
    %v1045 = vmul.f32 %v1029, %v1042
    %v1046 = vmul.f32 %v1031, %v1043
    %v1048 = vsel %vm1013, %v1044, 0
    %1050 = vmatprep.subr.mxu0 0.0
    %1051 = vmatpush1.msra.mxu0 %v641
    %1052 = vmatprep.subr.mxu0 0.0
    %1053 = vmatpush1.msra.mxu0 0.0
    %1054 = vmatprep.subr.mxu0 0.0
    %1055 = vmatpush1.msra.mxu0 0.0
    %1056 = vmatprep.subr.mxu0 0.0
    %1057 = vmatpush1.msra.mxu0 0.0
    %1058 = vmatprep.subr.mxu0 0.0
    %1059 = vmatpush1.msra.mxu0 0.0
    %1060 = vmatprep.subr.mxu0 0.0
    %1061 = vmatpush1.msra.mxu0 0.0
    %1062 = vmatprep.subr.mxu0 0.0
    %1063 = vmatpush1.msra.mxu0 0.0
    %1064 = vmatprep.subr.mxu0 0.0
    %1065 = vmatpush1.msra.mxu0 0.0
    %1066 = vmatprep.subr.mxu0 0.0
    %1067 = vmatpush1.msra.mxu0 0.0
    %1068 = vmatprep.subr.mxu0 0.0
    %1069 = vmatpush1.msra.mxu0 0.0
    %1070 = vmatprep.subr.mxu0 0.0
    %1071 = vmatpush1.msra.mxu0 0.0
    %1072 = vmatprep.subr.mxu0 0.0
    %1073 = vmatpush1.msra.mxu0 0.0
    %1074 = vmatprep.subr.mxu0 0.0
    %1075 = vmatpush1.msra.mxu0 0.0
    %1076 = vmatprep.subr.mxu0 0.0
    %1077 = vmatpush1.msra.mxu0 0.0
    %1078 = vmatprep.subr.mxu0 0.0
    %1079 = vmatpush1.msra.mxu0 0.0
    %1080 = vmatprep.subr.mxu0 0.0
    %1081 = vmatpush1.msra.mxu0 0.0
    %1082 = vmatprep.subr.mxu0 0.0
    %1083 = vmatpush1.msra.mxu0 0.0
    %1084 = vmatprep.subr.mxu0 0.0
    %1085 = vmatpush1.msra.mxu0 0.0
    %1086 = vmatprep.subr.mxu0 0.0
    %1087 = vmatpush1.msra.mxu0 0.0
    %1088 = vmatprep.subr.mxu0 0.0
    %1089 = vmatpush1.msra.mxu0 0.0
    %1090 = vmatprep.subr.mxu0 0.0
    %1091 = vmatpush1.msra.mxu0 0.0
    %1092 = vmatprep.subr.mxu0 0.0
    %1093 = vmatpush1.msra.mxu0 0.0
    %1094 = vmatprep.subr.mxu0 0.0
    %1095 = vmatpush1.msra.mxu0 0.0
    %1096 = vmatprep.subr.mxu0 0.0
    %1097 = vmatpush1.msra.mxu0 0.0
    %1098 = vmatprep.subr.mxu0 0.0
    %1099 = vmatpush1.msra.mxu0 0.0
    %1100 = vmatprep.subr.mxu0 0.0
    %1101 = vmatpush1.msra.mxu0 0.0
    %1102 = vmatprep.subr.mxu0 0.0
    %1103 = vmatpush1.msra.mxu0 0.0
    %1104 = vmatprep.subr.mxu0 0.0
    %1105 = vmatpush1.msra.mxu0 0.0
    %1106 = vmatprep.subr.mxu0 0.0
    %1107 = vmatpush1.msra.mxu0 0.0
    %1108 = vmatprep.subr.mxu0 0.0
    %1109 = vmatpush1.msra.mxu0 0.0
    %1110 = vmatprep.subr.mxu0 0.0
    %1111 = vmatpush1.msra.mxu0 0.0
    %1112 = vmatprep.subr.mxu0 0.0
    %1113 = vmatpush1.msra.mxu0 0.0
    %1114 = vmatprep.mubr.f32.mxu0 0.0
    %1115 = vmatmul.mubr.f32.gmra.mrb[0].mxu0 %v1048
    %v1116 = vpop.f32.mrb[0].mxu0
    %v1117 = vadd.f32 0.0, %v1116
    %v1118 = vpop.f32.mrb[0].mxu0
    %1119 = vdwg.mxu0
    %v1121 = vsel %vm1013, %v1045, 0
    %1123 = vmatprep.subr.mxu0 0.0
    %1124 = vmatpush1.msra.mxu0 %v711
    %1125 = vmatprep.subr.mxu0 0.0
    %1126 = vmatpush1.msra.mxu0 0.0
    %1127 = vmatprep.subr.mxu0 0.0
    %1128 = vmatpush1.msra.mxu0 0.0
    %1129 = vmatprep.subr.mxu0 0.0
    %1130 = vmatpush1.msra.mxu0 0.0
    %1131 = vmatprep.subr.mxu0 0.0
    %1132 = vmatpush1.msra.mxu0 0.0
    %1133 = vmatprep.subr.mxu0 0.0
    %1134 = vmatpush1.msra.mxu0 0.0
    %1135 = vmatprep.subr.mxu0 0.0
    %1136 = vmatpush1.msra.mxu0 0.0
    %1137 = vmatprep.subr.mxu0 0.0
    %1138 = vmatpush1.msra.mxu0 0.0
    %1139 = vmatprep.subr.mxu0 0.0
    %1140 = vmatpush1.msra.mxu0 0.0
    %1141 = vmatprep.subr.mxu0 0.0
    %1142 = vmatpush1.msra.mxu0 0.0
    %1143 = vmatprep.subr.mxu0 0.0
    %1144 = vmatpush1.msra.mxu0 0.0
    %1145 = vmatprep.subr.mxu0 0.0
    %1146 = vmatpush1.msra.mxu0 0.0
    %1147 = vmatprep.subr.mxu0 0.0
    %1148 = vmatpush1.msra.mxu0 0.0
    %1149 = vmatprep.subr.mxu0 0.0
    %1150 = vmatpush1.msra.mxu0 0.0
    %1151 = vmatprep.subr.mxu0 0.0
    %1152 = vmatpush1.msra.mxu0 0.0
    %1153 = vmatprep.subr.mxu0 0.0
    %1154 = vmatpush1.msra.mxu0 0.0
    %1155 = vmatprep.subr.mxu0 0.0
    %1156 = vmatpush1.msra.mxu0 0.0
    %1157 = vmatprep.subr.mxu0 0.0
    %1158 = vmatpush1.msra.mxu0 0.0
    %1159 = vmatprep.subr.mxu0 0.0
    %1160 = vmatpush1.msra.mxu0 0.0
    %1161 = vmatprep.subr.mxu0 0.0
    %1162 = vmatpush1.msra.mxu0 0.0
    %1163 = vmatprep.subr.mxu0 0.0
    %1164 = vmatpush1.msra.mxu0 0.0
    %1165 = vmatprep.subr.mxu0 0.0
    %1166 = vmatpush1.msra.mxu0 0.0
    %1167 = vmatprep.subr.mxu0 0.0
    %1168 = vmatpush1.msra.mxu0 0.0
    %1169 = vmatprep.subr.mxu0 0.0
    %1170 = vmatpush1.msra.mxu0 0.0
    %1171 = vmatprep.subr.mxu0 0.0
    %1172 = vmatpush1.msra.mxu0 0.0
    %1173 = vmatprep.subr.mxu0 0.0
    %1174 = vmatpush1.msra.mxu0 0.0
    %1175 = vmatprep.subr.mxu0 0.0
    %1176 = vmatpush1.msra.mxu0 0.0
    %1177 = vmatprep.subr.mxu0 0.0
    %1178 = vmatpush1.msra.mxu0 0.0
    %1179 = vmatprep.subr.mxu0 0.0
    %1180 = vmatpush1.msra.mxu0 0.0
    %1181 = vmatprep.subr.mxu0 0.0
    %1182 = vmatpush1.msra.mxu0 0.0
    %1183 = vmatprep.subr.mxu0 0.0
    %1184 = vmatpush1.msra.mxu0 0.0
    %1185 = vmatprep.subr.mxu0 0.0
    %1186 = vmatpush1.msra.mxu0 0.0
    %1187 = vmatprep.mubr.f32.mxu0 0.0
    %1188 = vmatmul.mubr.f32.gmra.mrb[0].mxu0 %v1121
    %v1189 = vpop.f32.mrb[0].mxu0
    %v1190 = vadd.f32 0.0, %v1189
    %v1191 = vpop.f32.mrb[0].mxu0
    %1192 = vdwg.mxu0
    %v1194 = vsel %vm1013, %v1046, 0
    %1196 = vmatprep.subr.mxu0 0.0
    %1197 = vmatpush1.msra.mxu0 %v781
    %1198 = vmatprep.subr.mxu0 0.0
    %1199 = vmatpush1.msra.mxu0 0.0
    %1200 = vmatprep.subr.mxu0 0.0
    %1201 = vmatpush1.msra.mxu0 0.0
    %1202 = vmatprep.subr.mxu0 0.0
    %1203 = vmatpush1.msra.mxu0 0.0
    %1204 = vmatprep.subr.mxu0 0.0
    %1205 = vmatpush1.msra.mxu0 0.0
    %1206 = vmatprep.subr.mxu0 0.0
    %1207 = vmatpush1.msra.mxu0 0.0
    %1208 = vmatprep.subr.mxu0 0.0
    %1209 = vmatpush1.msra.mxu0 0.0
    %1210 = vmatprep.subr.mxu0 0.0
    %1211 = vmatpush1.msra.mxu0 0.0
    %1212 = vmatprep.subr.mxu0 0.0
    %1213 = vmatpush1.msra.mxu0 0.0
    %1214 = vmatprep.subr.mxu0 0.0
    %1215 = vmatpush1.msra.mxu0 0.0
    %1216 = vmatprep.subr.mxu0 0.0
    %1217 = vmatpush1.msra.mxu0 0.0
    %1218 = vmatprep.subr.mxu0 0.0
    %1219 = vmatpush1.msra.mxu0 0.0
    %1220 = vmatprep.subr.mxu0 0.0
    %1221 = vmatpush1.msra.mxu0 0.0
    %1222 = vmatprep.subr.mxu0 0.0
    %1223 = vmatpush1.msra.mxu0 0.0
    %1224 = vmatprep.subr.mxu0 0.0
    %1225 = vmatpush1.msra.mxu0 0.0
    %1226 = vmatprep.subr.mxu0 0.0
    %1227 = vmatpush1.msra.mxu0 0.0
    %1228 = vmatprep.subr.mxu0 0.0
    %1229 = vmatpush1.msra.mxu0 0.0
    %1230 = vmatprep.subr.mxu0 0.0
    %1231 = vmatpush1.msra.mxu0 0.0
    %1232 = vmatprep.subr.mxu0 0.0
    %1233 = vmatpush1.msra.mxu0 0.0
    %1234 = vmatprep.subr.mxu0 0.0
    %1235 = vmatpush1.msra.mxu0 0.0
    %1236 = vmatprep.subr.mxu0 0.0
    %1237 = vmatpush1.msra.mxu0 0.0
    %1238 = vmatprep.subr.mxu0 0.0
    %1239 = vmatpush1.msra.mxu0 0.0
    %1240 = vmatprep.subr.mxu0 0.0
    %1241 = vmatpush1.msra.mxu0 0.0
    %1242 = vmatprep.subr.mxu0 0.0
    %1243 = vmatpush1.msra.mxu0 0.0
    %1244 = vmatprep.subr.mxu0 0.0
    %1245 = vmatpush1.msra.mxu0 0.0
    %1246 = vmatprep.subr.mxu0 0.0
    %1247 = vmatpush1.msra.mxu0 0.0
    %1248 = vmatprep.subr.mxu0 0.0
    %1249 = vmatpush1.msra.mxu0 0.0
    %1250 = vmatprep.subr.mxu0 0.0
    %1251 = vmatpush1.msra.mxu0 0.0
    %1252 = vmatprep.subr.mxu0 0.0
    %1253 = vmatpush1.msra.mxu0 0.0
    %1254 = vmatprep.subr.mxu0 0.0
    %1255 = vmatpush1.msra.mxu0 0.0
    %1256 = vmatprep.subr.mxu0 0.0
    %1257 = vmatpush1.msra.mxu0 0.0
    %1258 = vmatprep.subr.mxu0 0.0
    %1259 = vmatpush1.msra.mxu0 0.0
    %1260 = vmatprep.mubr.f32.mxu0 0.0
    %1261 = vmatmul.mubr.f32.gmra.mrb[0].mxu0 %v1194
    %v1262 = vpop.f32.mrb[0].mxu0
    %v1263 = vadd.f32 0.0, %v1262
    %v1264 = vpop.f32.mrb[0].mxu0
    %1265 = vdwg.mxu0
    %v1267 = vsel %vm784, %v1117, 0
    %1269 = vmatprep.subr.mxu0 0.0
    %1270 = vmatpush1.msra.mxu0 %v89
    %1271 = vmatprep.subr.mxu0 0.0
    %1272 = vmatpush1.msra.mxu0 %v90
    %1273 = vmatprep.subr.mxu0 0.0
    %1274 = vmatpush1.msra.mxu0 0.0
    %1275 = vmatprep.subr.mxu0 0.0
    %1276 = vmatpush1.msra.mxu0 0.0
    %1277 = vmatprep.subr.mxu0 0.0
    %1278 = vmatpush1.msra.mxu0 0.0
    %1279 = vmatprep.subr.mxu0 0.0
    %1280 = vmatpush1.msra.mxu0 0.0
    %1281 = vmatprep.subr.mxu0 0.0
    %1282 = vmatpush1.msra.mxu0 0.0
    %1283 = vmatprep.subr.mxu0 0.0
    %1284 = vmatpush1.msra.mxu0 0.0
    %1285 = vmatprep.subr.mxu0 0.0
    %1286 = vmatpush1.msra.mxu0 0.0
    %1287 = vmatprep.subr.mxu0 0.0
    %1288 = vmatpush1.msra.mxu0 0.0
    %1289 = vmatprep.subr.mxu0 0.0
    %1290 = vmatpush1.msra.mxu0 0.0
    %1291 = vmatprep.subr.mxu0 0.0
    %1292 = vmatpush1.msra.mxu0 0.0
    %1293 = vmatprep.subr.mxu0 0.0
    %1294 = vmatpush1.msra.mxu0 0.0
    %1295 = vmatprep.subr.mxu0 0.0
    %1296 = vmatpush1.msra.mxu0 0.0
    %1297 = vmatprep.subr.mxu0 0.0
    %1298 = vmatpush1.msra.mxu0 0.0
    %1299 = vmatprep.subr.mxu0 0.0
    %1300 = vmatpush1.msra.mxu0 0.0
    %1301 = vmatprep.subr.mxu0 0.0
    %1302 = vmatpush1.msra.mxu0 0.0
    %1303 = vmatprep.subr.mxu0 0.0
    %1304 = vmatpush1.msra.mxu0 0.0
    %1305 = vmatprep.subr.mxu0 0.0
    %1306 = vmatpush1.msra.mxu0 0.0
    %1307 = vmatprep.subr.mxu0 0.0
    %1308 = vmatpush1.msra.mxu0 0.0
    %1309 = vmatprep.subr.mxu0 0.0
    %1310 = vmatpush1.msra.mxu0 0.0
    %1311 = vmatprep.subr.mxu0 0.0
    %1312 = vmatpush1.msra.mxu0 0.0
    %1313 = vmatprep.subr.mxu0 0.0
    %1314 = vmatpush1.msra.mxu0 0.0
    %1315 = vmatprep.subr.mxu0 0.0
    %1316 = vmatpush1.msra.mxu0 0.0
    %1317 = vmatprep.subr.mxu0 0.0
    %1318 = vmatpush1.msra.mxu0 0.0
    %1319 = vmatprep.subr.mxu0 0.0
    %1320 = vmatpush1.msra.mxu0 0.0
    %1321 = vmatprep.subr.mxu0 0.0
    %1322 = vmatpush1.msra.mxu0 0.0
    %1323 = vmatprep.subr.mxu0 0.0
    %1324 = vmatpush1.msra.mxu0 0.0
    %1325 = vmatprep.subr.mxu0 0.0
    %1326 = vmatpush1.msra.mxu0 0.0
    %1327 = vmatprep.subr.mxu0 0.0
    %1328 = vmatpush1.msra.mxu0 0.0
    %1329 = vmatprep.subr.mxu0 0.0
    %1330 = vmatpush1.msra.mxu0 0.0
    %1331 = vmatprep.subr.mxu0 0.0
    %1332 = vmatpush1.msra.mxu0 0.0
    %1333 = vmatprep.mubr.f32.mxu0 0.0
    %1334 = vmatmul.mubr.f32.gmra.mrb[0].mxu0 %v1267
    %v1335 = vpop.f32.mrb[0].mxu0
    %v1336 = vadd.f32 0.0, %v1335
    %v1337 = vpop.f32.mrb[0].mxu0
    %1338 = vdwg.mxu0
    %v1340 = vsel %vm784, %v1190, 0
    %1342 = vmatprep.subr.mxu0 0.0
    %1343 = vmatpush1.msra.mxu0 %v91
    %1344 = vmatprep.subr.mxu0 0.0
    %1345 = vmatpush1.msra.mxu0 %v92
    %1346 = vmatprep.subr.mxu0 0.0
    %1347 = vmatpush1.msra.mxu0 0.0
    %1348 = vmatprep.subr.mxu0 0.0
    %1349 = vmatpush1.msra.mxu0 0.0
    %1350 = vmatprep.subr.mxu0 0.0
    %1351 = vmatpush1.msra.mxu0 0.0
    %1352 = vmatprep.subr.mxu0 0.0
    %1353 = vmatpush1.msra.mxu0 0.0
    %1354 = vmatprep.subr.mxu0 0.0
    %1355 = vmatpush1.msra.mxu0 0.0
    %1356 = vmatprep.subr.mxu0 0.0
    %1357 = vmatpush1.msra.mxu0 0.0
    %1358 = vmatprep.subr.mxu0 0.0
    %1359 = vmatpush1.msra.mxu0 0.0
    %1360 = vmatprep.subr.mxu0 0.0
    %1361 = vmatpush1.msra.mxu0 0.0
    %1362 = vmatprep.subr.mxu0 0.0
    %1363 = vmatpush1.msra.mxu0 0.0
    %1364 = vmatprep.subr.mxu0 0.0
    %1365 = vmatpush1.msra.mxu0 0.0
    %1366 = vmatprep.subr.mxu0 0.0
    %1367 = vmatpush1.msra.mxu0 0.0
    %1368 = vmatprep.subr.mxu0 0.0
    %1369 = vmatpush1.msra.mxu0 0.0
    %1370 = vmatprep.subr.mxu0 0.0
    %1371 = vmatpush1.msra.mxu0 0.0
    %1372 = vmatprep.subr.mxu0 0.0
    %1373 = vmatpush1.msra.mxu0 0.0
    %1374 = vmatprep.subr.mxu0 0.0
    %1375 = vmatpush1.msra.mxu0 0.0
    %1376 = vmatprep.subr.mxu0 0.0
    %1377 = vmatpush1.msra.mxu0 0.0
    %1378 = vmatprep.subr.mxu0 0.0
    %1379 = vmatpush1.msra.mxu0 0.0
    %1380 = vmatprep.subr.mxu0 0.0
    %1381 = vmatpush1.msra.mxu0 0.0
    %1382 = vmatprep.subr.mxu0 0.0
    %1383 = vmatpush1.msra.mxu0 0.0
    %1384 = vmatprep.subr.mxu0 0.0
    %1385 = vmatpush1.msra.mxu0 0.0
    %1386 = vmatprep.subr.mxu0 0.0
    %1387 = vmatpush1.msra.mxu0 0.0
    %1388 = vmatprep.subr.mxu0 0.0
    %1389 = vmatpush1.msra.mxu0 0.0
    %1390 = vmatprep.subr.mxu0 0.0
    %1391 = vmatpush1.msra.mxu0 0.0
    %1392 = vmatprep.subr.mxu0 0.0
    %1393 = vmatpush1.msra.mxu0 0.0
    %1394 = vmatprep.subr.mxu0 0.0
    %1395 = vmatpush1.msra.mxu0 0.0
    %1396 = vmatprep.subr.mxu0 0.0
    %1397 = vmatpush1.msra.mxu0 0.0
    %1398 = vmatprep.subr.mxu0 0.0
    %1399 = vmatpush1.msra.mxu0 0.0
    %1400 = vmatprep.subr.mxu0 0.0
    %1401 = vmatpush1.msra.mxu0 0.0
    %1402 = vmatprep.subr.mxu0 0.0
    %1403 = vmatpush1.msra.mxu0 0.0
    %1404 = vmatprep.subr.mxu0 0.0
    %1405 = vmatpush1.msra.mxu0 0.0
    %1406 = vmatprep.mubr.f32.mxu0 0.0
    %1407 = vmatmul.mubr.f32.gmra.mrb[0].mxu0 %v1340
    %v1408 = vpop.f32.mrb[0].mxu0
    %v1409 = vadd.f32 0.0, %v1408
    %v1410 = vpop.f32.mrb[0].mxu0
    %1411 = vdwg.mxu0
    %v1413 = vsel %vm784, %v1263, 0
    %1415 = vmatprep.subr.mxu0 0.0
    %1416 = vmatpush1.msra.mxu0 %v93
    %1417 = vmatprep.subr.mxu0 0.0
    %1418 = vmatpush1.msra.mxu0 %v94
    %1419 = vmatprep.subr.mxu0 0.0
    %1420 = vmatpush1.msra.mxu0 0.0
    %1421 = vmatprep.subr.mxu0 0.0
    %1422 = vmatpush1.msra.mxu0 0.0
    %1423 = vmatprep.subr.mxu0 0.0
    %1424 = vmatpush1.msra.mxu0 0.0
    %1425 = vmatprep.subr.mxu0 0.0
    %1426 = vmatpush1.msra.mxu0 0.0
    %1427 = vmatprep.subr.mxu0 0.0
    %1428 = vmatpush1.msra.mxu0 0.0
    %1429 = vmatprep.subr.mxu0 0.0
    %1430 = vmatpush1.msra.mxu0 0.0
    %1431 = vmatprep.subr.mxu0 0.0
    %1432 = vmatpush1.msra.mxu0 0.0
    %1433 = vmatprep.subr.mxu0 0.0
    %1434 = vmatpush1.msra.mxu0 0.0
    %1435 = vmatprep.subr.mxu0 0.0
    %1436 = vmatpush1.msra.mxu0 0.0
    %1437 = vmatprep.subr.mxu0 0.0
    %1438 = vmatpush1.msra.mxu0 0.0
    %1439 = vmatprep.subr.mxu0 0.0
    %1440 = vmatpush1.msra.mxu0 0.0
    %1441 = vmatprep.subr.mxu0 0.0
    %1442 = vmatpush1.msra.mxu0 0.0
    %1443 = vmatprep.subr.mxu0 0.0
    %1444 = vmatpush1.msra.mxu0 0.0
    %1445 = vmatprep.subr.mxu0 0.0
    %1446 = vmatpush1.msra.mxu0 0.0
    %1447 = vmatprep.subr.mxu0 0.0
    %1448 = vmatpush1.msra.mxu0 0.0
    %1449 = vmatprep.subr.mxu0 0.0
    %1450 = vmatpush1.msra.mxu0 0.0
    %1451 = vmatprep.subr.mxu0 0.0
    %1452 = vmatpush1.msra.mxu0 0.0
    %1453 = vmatprep.subr.mxu0 0.0
    %1454 = vmatpush1.msra.mxu0 0.0
    %1455 = vmatprep.subr.mxu0 0.0
    %1456 = vmatpush1.msra.mxu0 0.0
    %1457 = vmatprep.subr.mxu0 0.0
    %1458 = vmatpush1.msra.mxu0 0.0
    %1459 = vmatprep.subr.mxu0 0.0
    %1460 = vmatpush1.msra.mxu0 0.0
    %1461 = vmatprep.subr.mxu0 0.0
    %1462 = vmatpush1.msra.mxu0 0.0
    %1463 = vmatprep.subr.mxu0 0.0
    %1464 = vmatpush1.msra.mxu0 0.0
    %1465 = vmatprep.subr.mxu0 0.0
    %1466 = vmatpush1.msra.mxu0 0.0
    %1467 = vmatprep.subr.mxu0 0.0
    %1468 = vmatpush1.msra.mxu0 0.0
    %1469 = vmatprep.subr.mxu0 0.0
    %1470 = vmatpush1.msra.mxu0 0.0
    %1471 = vmatprep.subr.mxu0 0.0
    %1472 = vmatpush1.msra.mxu0 0.0
    %1473 = vmatprep.subr.mxu0 0.0
    %1474 = vmatpush1.msra.mxu0 0.0
    %1475 = vmatprep.subr.mxu0 0.0
    %1476 = vmatpush1.msra.mxu0 0.0
    %1477 = vmatprep.subr.mxu0 0.0
    %1478 = vmatpush1.msra.mxu0 0.0
    %1479 = vmatprep.mubr.f32.mxu0 0.0
    %1480 = vmatmul.mubr.f32.gmra.mrb[0].mxu0 %v1413
    %v1481 = vpop.f32.mrb[0].mxu0
    %v1482 = vadd.f32 0.0, %v1481
    %v1483 = vpop.f32.mrb[0].mxu0
    %1484 = vdwg.mxu0
    %v1485 = vsel %vm150, %v1336, 0.0
    %v1486 = vsel %vm150, %v1409, 0.0
    %v1487 = vadd.f32 %v1485, %v1486
    %v1488 = vsel %vm150, %v1482, 0.0
    %v1489 = vadd.f32 %v1487, %v1488
    %v1491 = vlaneseq
    %v1492 = vshrl.u32 %v1491, 7
    %v1493 = vsub.s32 0, %v1492
    %v1494 = vrot.slane %v95, %v1493
    %v1496 = vadd.f32 %v1489, %v1494
    %s1497 = scalar_lea.vmem %s2, 432
    %v1498 = vld [vmem:[%s1497] sm:$0xff]
    %v1499 = vld [vmem:[%s1497 + $0x8] sm:$0xff]
    %v1500 = vld [vmem:[%s1497 + $0x10] sm:$0xff]
    %v1501 = vld [vmem:[%s1497 + $0x18] sm:$0xff]
    %v1502 = vld [vmem:[%s1497 + $0x20] sm:$0xff]
    %v1503 = vld [vmem:[%s1497 + $0x28] sm:$0xff]
    %v1504 = vld [vmem:[%s1497 + $0x30] sm:$0xff]
    %v1505 = vld [vmem:[%s1497 + $0x38] sm:$0xff]
    %v1506 = vld [vmem:[%s1497 + $0x40] sm:$0xff]
    %v1507 = vld [vmem:[%s1497 + $0x48] sm:$0xff]
    %v1508 = vld [vmem:[%s1497 + $0x50] sm:$0xff]
    %v1509 = vld [vmem:[%s1497 + $0x58] sm:$0xff]
    %v1510 = vld [vmem:[%s1497 + $0x60] sm:$0xff]
    %v1511 = vld [vmem:[%s1497 + $0x68] sm:$0xff]
    %v1512 = vld [vmem:[%s1497 + $0x70] sm:$0xff]
    %v1513 = vld [vmem:[%s1497 + $0x78] sm:$0xff]
    %v1514 = vld [vmem:[%s1497 + $0x80] sm:$0xff]
    %v1515 = vld [vmem:[%s1497 + $0x88] sm:$0xff]
    %v1516 = vld [vmem:[%s1497 + $0x90] sm:$0xff]
    %v1517 = vld [vmem:[%s1497 + $0x98] sm:$0xff]
    %v1518 = vld [vmem:[%s1497 + $0xa0] sm:$0xff]
    %v1519 = vld [vmem:[%s1497 + $0xa8] sm:$0xff]
    %v1520 = vld [vmem:[%s1497 + $0xb0] sm:$0xff]
    %v1521 = vld [vmem:[%s1497 + $0xb8] sm:$0xff]
    %v1522 = vld [vmem:[%s1497 + $0xc0] sm:$0xff]
    %v1523 = vld [vmem:[%s1497 + $0xc8] sm:$0xff]
    %v1524 = vld [vmem:[%s1497 + $0xd0] sm:$0xff]
    %v1525 = vld [vmem:[%s1497 + $0xd8] sm:$0xff]
    %v1526 = vld [vmem:[%s1497 + $0xe0] sm:$0xff]
    %v1527 = vld [vmem:[%s1497 + $0xe8] sm:$0xff]
    %v1528 = vld [vmem:[%s1497 + $0xf0] sm:$0xff]
    %v1529 = vld [vmem:[%s1497 + $0xf8] sm:$0xff]
    %v1530 = vld [vmem:[%s1497 + $0x100] sm:$0xff]
    %v1531 = vld [vmem:[%s1497 + $0x108] sm:$0xff]
    %v1532 = vld [vmem:[%s1497 + $0x110] sm:$0xff]
    %v1533 = vld [vmem:[%s1497 + $0x118] sm:$0xff]
    %v1534 = vld [vmem:[%s1497 + $0x120] sm:$0xff]
    %v1535 = vld [vmem:[%s1497 + $0x128] sm:$0xff]
    %v1536 = vld [vmem:[%s1497 + $0x130] sm:$0xff]
    %v1537 = vld [vmem:[%s1497 + $0x138] sm:$0xff]
    %v1538 = vld [vmem:[%s1497 + $0x140] sm:$0xff]
    %v1539 = vld [vmem:[%s1497 + $0x148] sm:$0xff]
    %v1540 = vld [vmem:[%s1497 + $0x150] sm:$0xff]
    %v1541 = vld [vmem:[%s1497 + $0x158] sm:$0xff]
    %v1542 = vld [vmem:[%s1497 + $0x160] sm:$0xff]
    %v1543 = vld [vmem:[%s1497 + $0x168] sm:$0xff]
    %v1544 = vld [vmem:[%s1497 + $0x170] sm:$0xff]
    %v1545 = vld [vmem:[%s1497 + $0x178] sm:$0xff]
    %v1546 = vld [vmem:[%s1497 + $0x180] sm:$0xff]
    %v1547 = vld [vmem:[%s1497 + $0x188] sm:$0xff]
    %v1548 = vld [vmem:[%s1497 + $0x190] sm:$0xff]
    %v1549 = vld [vmem:[%s1497 + $0x198] sm:$0xff]
    %v1550 = vld [vmem:[%s1497 + $0x1a0] sm:$0xff]
    %v1551 = vld [vmem:[%s1497 + $0x1a8] sm:$0xff]
    %s1552 = scalar_lea.vmem %s3, 9
    %v1553 = vld [vmem:[%s1552] sm:$0x1]
    %v1554 = vld [vmem:[%s1552 + $0x1] sm:$0x1]
    %v1555 = vld [vmem:[%s1552 + $0x2] sm:$0x1]
    %v1556 = vld [vmem:[%s1552 + $0x3] sm:$0x1]
    %v1557 = vld [vmem:[%s1552 + $0x4] sm:$0x1]
    %v1558 = vld [vmem:[%s1552 + $0x5] sm:$0x1]
    %v1559 = vld [vmem:[%s1552 + $0x6] sm:$0x1]
    %v1560 = vld [vmem:[%s1552 + $0x7] sm:$0x1]
    %v1561 = vld [vmem:[%s1552 + $0x8] sm:$0x1]
    %s1562 = scalar_lea.vmem %s4, 48
    %v1563 = vld [vmem:[%s1562] sm:$0xff]
    %v1564 = vld [vmem:[%s1562 + $0x8] sm:$0xff]
    %v1565 = vld [vmem:[%s1562 + $0x10] sm:$0xff]
    %v1566 = vld [vmem:[%s1562 + $0x18] sm:$0xff]
    %v1567 = vld [vmem:[%s1562 + $0x20] sm:$0xff]
    %v1568 = vld [vmem:[%s1562 + $0x28] sm:$0xff]
    %s1569 = scalar_lea.vmem %s5, 1
    %v1570 = vld [vmem:[%s1569] sm:$0x1]
    %v1580 = vlaneseq
    %v1581 = vshrl.u32 %v1580, 7
    %v1582 = vsub.s32 0, %v1581
    %v1583 = vrot.slane %v1553, %v1582
    %v1584 = vlaneseq
    %v1585 = vshrl.u32 %v1584, 7
    %v1586 = vsub.s32 0, %v1585
    %v1587 = vrot.slane %v1554, %v1586
    %v1588 = vlaneseq
    %v1589 = vshrl.u32 %v1588, 7
    %v1590 = vsub.s32 0, %v1589
    %v1591 = vrot.slane %v1555, %v1590
    %v1592 = vlaneseq
    %v1593 = vshrl.u32 %v1592, 7
    %v1594 = vsub.s32 0, %v1593
    %v1595 = vrot.slane %v1556, %v1594
    %v1596 = vlaneseq
    %v1597 = vshrl.u32 %v1596, 7
    %v1598 = vsub.s32 0, %v1597
    %v1599 = vrot.slane %v1557, %v1598
    %v1600 = vlaneseq
    %v1601 = vshrl.u32 %v1600, 7
    %v1602 = vsub.s32 0, %v1601
    %v1603 = vrot.slane %v1558, %v1602
    %v1604 = vlaneseq
    %v1605 = vshrl.u32 %v1604, 7
    %v1606 = vsub.s32 0, %v1605
    %v1607 = vrot.slane %v1559, %v1606
    %v1608 = vlaneseq
    %v1609 = vshrl.u32 %v1608, 7
    %v1610 = vsub.s32 0, %v1609
    %v1611 = vrot.slane %v1560, %v1610
    %v1612 = vlaneseq
    %v1613 = vshrl.u32 %v1612, 7
    %v1614 = vsub.s32 0, %v1613
    %v1615 = vrot.slane %v1561, %v1614
    %v1626 = vsel %vm150, %v1496, 0
    %1628 = vmatprep.subr.mxu0 0.0
    %1629 = vmatpush1.msra.mxu0 %v1498
    %1630 = vmatprep.subr.mxu0 0.0
    %1631 = vmatpush1.msra.mxu0 %v1499
    %1632 = vmatprep.subr.mxu0 0.0
    %1633 = vmatpush1.msra.mxu0 %v1500
    %1634 = vmatprep.subr.mxu0 0.0
    %1635 = vmatpush1.msra.mxu0 %v1501
    %1636 = vmatprep.subr.mxu0 0.0
    %1637 = vmatpush1.msra.mxu0 %v1502
    %1638 = vmatprep.subr.mxu0 0.0
    %1639 = vmatpush1.msra.mxu0 %v1503
    %1640 = vmatprep.subr.mxu0 0.0
    %1641 = vmatpush1.msra.mxu0 0.0
    %1642 = vmatprep.subr.mxu0 0.0
    %1643 = vmatpush1.msra.mxu0 0.0
    %1644 = vmatprep.subr.mxu0 0.0
    %1645 = vmatpush1.msra.mxu0 0.0
    %1646 = vmatprep.subr.mxu0 0.0
    %1647 = vmatpush1.msra.mxu0 0.0
    %1648 = vmatprep.subr.mxu0 0.0
    %1649 = vmatpush1.msra.mxu0 0.0
    %1650 = vmatprep.subr.mxu0 0.0
    %1651 = vmatpush1.msra.mxu0 0.0
    %1652 = vmatprep.subr.mxu0 0.0
    %1653 = vmatpush1.msra.mxu0 0.0
    %1654 = vmatprep.subr.mxu0 0.0
    %1655 = vmatpush1.msra.mxu0 0.0
    %1656 = vmatprep.subr.mxu0 0.0
    %1657 = vmatpush1.msra.mxu0 0.0
    %1658 = vmatprep.subr.mxu0 0.0
    %1659 = vmatpush1.msra.mxu0 0.0
    %1660 = vmatprep.subr.mxu0 0.0
    %1661 = vmatpush1.msra.mxu0 0.0
    %1662 = vmatprep.subr.mxu0 0.0
    %1663 = vmatpush1.msra.mxu0 0.0
    %1664 = vmatprep.subr.mxu0 0.0
    %1665 = vmatpush1.msra.mxu0 0.0
    %1666 = vmatprep.subr.mxu0 0.0
    %1667 = vmatpush1.msra.mxu0 0.0
    %1668 = vmatprep.subr.mxu0 0.0
    %1669 = vmatpush1.msra.mxu0 0.0
    %1670 = vmatprep.subr.mxu0 0.0
    %1671 = vmatpush1.msra.mxu0 0.0
    %1672 = vmatprep.subr.mxu0 0.0
    %1673 = vmatpush1.msra.mxu0 0.0
    %1674 = vmatprep.subr.mxu0 0.0
    %1675 = vmatpush1.msra.mxu0 0.0
    %1676 = vmatprep.subr.mxu0 0.0
    %1677 = vmatpush1.msra.mxu0 0.0
    %1678 = vmatprep.subr.mxu0 0.0
    %1679 = vmatpush1.msra.mxu0 0.0
    %1680 = vmatprep.subr.mxu0 0.0
    %1681 = vmatpush1.msra.mxu0 0.0
    %1682 = vmatprep.subr.mxu0 0.0
    %1683 = vmatpush1.msra.mxu0 0.0
    %1684 = vmatprep.subr.mxu0 0.0
    %1685 = vmatpush1.msra.mxu0 0.0
    %1686 = vmatprep.subr.mxu0 0.0
    %1687 = vmatpush1.msra.mxu0 0.0
    %1688 = vmatprep.subr.mxu0 0.0
    %1689 = vmatpush1.msra.mxu0 0.0
    %1690 = vmatprep.subr.mxu0 0.0
    %1691 = vmatpush1.msra.mxu0 0.0
    %1692 = vmatprep.mubr.f32.mxu0 0.0
    %1693 = vmatmul.mubr.f32.gmra.mrb[0].mxu0 %v1626
    %v1694 = vpop.f32.mrb[0].mxu0
    %v1695 = vadd.f32 %v1583, %v1694
    %v1696 = vpop.f32.mrb[0].mxu0
    %1697 = vdwg.mxu0
    %1698 = vmatprep.subr.mxu0 0.0
    %1699 = vmatpush1.msra.mxu0 %v1504
    %1700 = vmatprep.subr.mxu0 0.0
    %1701 = vmatpush1.msra.mxu0 %v1505
    %1702 = vmatprep.subr.mxu0 0.0
    %1703 = vmatpush1.msra.mxu0 %v1506
    %1704 = vmatprep.subr.mxu0 0.0
    %1705 = vmatpush1.msra.mxu0 %v1507
    %1706 = vmatprep.subr.mxu0 0.0
    %1707 = vmatpush1.msra.mxu0 %v1508
    %1708 = vmatprep.subr.mxu0 0.0
    %1709 = vmatpush1.msra.mxu0 %v1509
    %1710 = vmatprep.subr.mxu0 0.0
    %1711 = vmatpush1.msra.mxu0 0.0
    %1712 = vmatprep.subr.mxu0 0.0
    %1713 = vmatpush1.msra.mxu0 0.0
    %1714 = vmatprep.subr.mxu0 0.0
    %1715 = vmatpush1.msra.mxu0 0.0
    %1716 = vmatprep.subr.mxu0 0.0
    %1717 = vmatpush1.msra.mxu0 0.0
    %1718 = vmatprep.subr.mxu0 0.0
    %1719 = vmatpush1.msra.mxu0 0.0
    %1720 = vmatprep.subr.mxu0 0.0
    %1721 = vmatpush1.msra.mxu0 0.0
    %1722 = vmatprep.subr.mxu0 0.0
    %1723 = vmatpush1.msra.mxu0 0.0
    %1724 = vmatprep.subr.mxu0 0.0
    %1725 = vmatpush1.msra.mxu0 0.0
    %1726 = vmatprep.subr.mxu0 0.0
    %1727 = vmatpush1.msra.mxu0 0.0
    %1728 = vmatprep.subr.mxu0 0.0
    %1729 = vmatpush1.msra.mxu0 0.0
    %1730 = vmatprep.subr.mxu0 0.0
    %1731 = vmatpush1.msra.mxu0 0.0
    %1732 = vmatprep.subr.mxu0 0.0
    %1733 = vmatpush1.msra.mxu0 0.0
    %1734 = vmatprep.subr.mxu0 0.0
    %1735 = vmatpush1.msra.mxu0 0.0
    %1736 = vmatprep.subr.mxu0 0.0
    %1737 = vmatpush1.msra.mxu0 0.0
    %1738 = vmatprep.subr.mxu0 0.0
    %1739 = vmatpush1.msra.mxu0 0.0
    %1740 = vmatprep.subr.mxu0 0.0
    %1741 = vmatpush1.msra.mxu0 0.0
    %1742 = vmatprep.subr.mxu0 0.0
    %1743 = vmatpush1.msra.mxu0 0.0
    %1744 = vmatprep.subr.mxu0 0.0
    %1745 = vmatpush1.msra.mxu0 0.0
    %1746 = vmatprep.subr.mxu0 0.0
    %1747 = vmatpush1.msra.mxu0 0.0
    %1748 = vmatprep.subr.mxu0 0.0
    %1749 = vmatpush1.msra.mxu0 0.0
    %1750 = vmatprep.subr.mxu0 0.0
    %1751 = vmatpush1.msra.mxu0 0.0
    %1752 = vmatprep.subr.mxu0 0.0
    %1753 = vmatpush1.msra.mxu0 0.0
    %1754 = vmatprep.subr.mxu0 0.0
    %1755 = vmatpush1.msra.mxu0 0.0
    %1756 = vmatprep.subr.mxu0 0.0
    %1757 = vmatpush1.msra.mxu0 0.0
    %1758 = vmatprep.subr.mxu0 0.0
    %1759 = vmatpush1.msra.mxu0 0.0
    %1760 = vmatprep.subr.mxu0 0.0
    %1761 = vmatpush1.msra.mxu0 0.0
    %1762 = vmatprep.mubr.f32.mxu0 0.0
    %1763 = vmatmul.mubr.f32.gmra.mrb[0].mxu0 %v1626
    %v1764 = vpop.f32.mrb[0].mxu0
    %v1765 = vadd.f32 %v1587, %v1764
    %v1766 = vpop.f32.mrb[0].mxu0
    %1767 = vdwg.mxu0
    %1768 = vmatprep.subr.mxu0 0.0
    %1769 = vmatpush1.msra.mxu0 %v1510
    %1770 = vmatprep.subr.mxu0 0.0
    %1771 = vmatpush1.msra.mxu0 %v1511
    %1772 = vmatprep.subr.mxu0 0.0
    %1773 = vmatpush1.msra.mxu0 %v1512
    %1774 = vmatprep.subr.mxu0 0.0
    %1775 = vmatpush1.msra.mxu0 %v1513
    %1776 = vmatprep.subr.mxu0 0.0
    %1777 = vmatpush1.msra.mxu0 %v1514
    %1778 = vmatprep.subr.mxu0 0.0
    %1779 = vmatpush1.msra.mxu0 %v1515
    %1780 = vmatprep.subr.mxu0 0.0
    %1781 = vmatpush1.msra.mxu0 0.0
    %1782 = vmatprep.subr.mxu0 0.0
    %1783 = vmatpush1.msra.mxu0 0.0
    %1784 = vmatprep.subr.mxu0 0.0
    %1785 = vmatpush1.msra.mxu0 0.0
    %1786 = vmatprep.subr.mxu0 0.0
    %1787 = vmatpush1.msra.mxu0 0.0
    %1788 = vmatprep.subr.mxu0 0.0
    %1789 = vmatpush1.msra.mxu0 0.0
    %1790 = vmatprep.subr.mxu0 0.0
    %1791 = vmatpush1.msra.mxu0 0.0
    %1792 = vmatprep.subr.mxu0 0.0
    %1793 = vmatpush1.msra.mxu0 0.0
    %1794 = vmatprep.subr.mxu0 0.0
    %1795 = vmatpush1.msra.mxu0 0.0
    %1796 = vmatprep.subr.mxu0 0.0
    %1797 = vmatpush1.msra.mxu0 0.0
    %1798 = vmatprep.subr.mxu0 0.0
    %1799 = vmatpush1.msra.mxu0 0.0
    %1800 = vmatprep.subr.mxu0 0.0
    %1801 = vmatpush1.msra.mxu0 0.0
    %1802 = vmatprep.subr.mxu0 0.0
    %1803 = vmatpush1.msra.mxu0 0.0
    %1804 = vmatprep.subr.mxu0 0.0
    %1805 = vmatpush1.msra.mxu0 0.0
    %1806 = vmatprep.subr.mxu0 0.0
    %1807 = vmatpush1.msra.mxu0 0.0
    %1808 = vmatprep.subr.mxu0 0.0
    %1809 = vmatpush1.msra.mxu0 0.0
    %1810 = vmatprep.subr.mxu0 0.0
    %1811 = vmatpush1.msra.mxu0 0.0
    %1812 = vmatprep.subr.mxu0 0.0
    %1813 = vmatpush1.msra.mxu0 0.0
    %1814 = vmatprep.subr.mxu0 0.0
    %1815 = vmatpush1.msra.mxu0 0.0
    %1816 = vmatprep.subr.mxu0 0.0
    %1817 = vmatpush1.msra.mxu0 0.0
    %1818 = vmatprep.subr.mxu0 0.0
    %1819 = vmatpush1.msra.mxu0 0.0
    %1820 = vmatprep.subr.mxu0 0.0
    %1821 = vmatpush1.msra.mxu0 0.0
    %1822 = vmatprep.subr.mxu0 0.0
    %1823 = vmatpush1.msra.mxu0 0.0
    %1824 = vmatprep.subr.mxu0 0.0
    %1825 = vmatpush1.msra.mxu0 0.0
    %1826 = vmatprep.subr.mxu0 0.0
    %1827 = vmatpush1.msra.mxu0 0.0
    %1828 = vmatprep.subr.mxu0 0.0
    %1829 = vmatpush1.msra.mxu0 0.0
    %1830 = vmatprep.subr.mxu0 0.0
    %1831 = vmatpush1.msra.mxu0 0.0
    %1832 = vmatprep.mubr.f32.mxu0 0.0
    %1833 = vmatmul.mubr.f32.gmra.mrb[0].mxu0 %v1626
    %v1834 = vpop.f32.mrb[0].mxu0
    %v1835 = vadd.f32 %v1591, %v1834
    %v1836 = vpop.f32.mrb[0].mxu0
    %1837 = vdwg.mxu0
    %1838 = vmatprep.subr.mxu0 0.0
    %1839 = vmatpush1.msra.mxu0 %v1516
    %1840 = vmatprep.subr.mxu0 0.0
    %1841 = vmatpush1.msra.mxu0 %v1517
    %1842 = vmatprep.subr.mxu0 0.0
    %1843 = vmatpush1.msra.mxu0 %v1518
    %1844 = vmatprep.subr.mxu0 0.0
    %1845 = vmatpush1.msra.mxu0 %v1519
    %1846 = vmatprep.subr.mxu0 0.0
    %1847 = vmatpush1.msra.mxu0 %v1520
    %1848 = vmatprep.subr.mxu0 0.0
    %1849 = vmatpush1.msra.mxu0 %v1521
    %1850 = vmatprep.subr.mxu0 0.0
    %1851 = vmatpush1.msra.mxu0 0.0
    %1852 = vmatprep.subr.mxu0 0.0
    %1853 = vmatpush1.msra.mxu0 0.0
    %1854 = vmatprep.subr.mxu0 0.0
    %1855 = vmatpush1.msra.mxu0 0.0
    %1856 = vmatprep.subr.mxu0 0.0
    %1857 = vmatpush1.msra.mxu0 0.0
    %1858 = vmatprep.subr.mxu0 0.0
    %1859 = vmatpush1.msra.mxu0 0.0
    %1860 = vmatprep.subr.mxu0 0.0
    %1861 = vmatpush1.msra.mxu0 0.0
    %1862 = vmatprep.subr.mxu0 0.0
    %1863 = vmatpush1.msra.mxu0 0.0
    %1864 = vmatprep.subr.mxu0 0.0
    %1865 = vmatpush1.msra.mxu0 0.0
    %1866 = vmatprep.subr.mxu0 0.0
    %1867 = vmatpush1.msra.mxu0 0.0
    %1868 = vmatprep.subr.mxu0 0.0
    %1869 = vmatpush1.msra.mxu0 0.0
    %1870 = vmatprep.subr.mxu0 0.0
    %1871 = vmatpush1.msra.mxu0 0.0
    %1872 = vmatprep.subr.mxu0 0.0
    %1873 = vmatpush1.msra.mxu0 0.0
    %1874 = vmatprep.subr.mxu0 0.0
    %1875 = vmatpush1.msra.mxu0 0.0
    %1876 = vmatprep.subr.mxu0 0.0
    %1877 = vmatpush1.msra.mxu0 0.0
    %1878 = vmatprep.subr.mxu0 0.0
    %1879 = vmatpush1.msra.mxu0 0.0
    %1880 = vmatprep.subr.mxu0 0.0
    %1881 = vmatpush1.msra.mxu0 0.0
    %1882 = vmatprep.subr.mxu0 0.0
    %1883 = vmatpush1.msra.mxu0 0.0
    %1884 = vmatprep.subr.mxu0 0.0
    %1885 = vmatpush1.msra.mxu0 0.0
    %1886 = vmatprep.subr.mxu0 0.0
    %1887 = vmatpush1.msra.mxu0 0.0
    %1888 = vmatprep.subr.mxu0 0.0
    %1889 = vmatpush1.msra.mxu0 0.0
    %1890 = vmatprep.subr.mxu0 0.0
    %1891 = vmatpush1.msra.mxu0 0.0
    %1892 = vmatprep.subr.mxu0 0.0
    %1893 = vmatpush1.msra.mxu0 0.0
    %1894 = vmatprep.subr.mxu0 0.0
    %1895 = vmatpush1.msra.mxu0 0.0
    %1896 = vmatprep.subr.mxu0 0.0
    %1897 = vmatpush1.msra.mxu0 0.0
    %1898 = vmatprep.subr.mxu0 0.0
    %1899 = vmatpush1.msra.mxu0 0.0
    %1900 = vmatprep.subr.mxu0 0.0
    %1901 = vmatpush1.msra.mxu0 0.0
    %1902 = vmatprep.mubr.f32.mxu0 0.0
    %1903 = vmatmul.mubr.f32.gmra.mrb[0].mxu0 %v1626
    %v1904 = vpop.f32.mrb[0].mxu0
    %v1905 = vadd.f32 %v1595, %v1904
    %v1906 = vpop.f32.mrb[0].mxu0
    %1907 = vdwg.mxu0
    %1908 = vmatprep.subr.mxu0 0.0
    %1909 = vmatpush1.msra.mxu0 %v1522
    %1910 = vmatprep.subr.mxu0 0.0
    %1911 = vmatpush1.msra.mxu0 %v1523
    %1912 = vmatprep.subr.mxu0 0.0
    %1913 = vmatpush1.msra.mxu0 %v1524
    %1914 = vmatprep.subr.mxu0 0.0
    %1915 = vmatpush1.msra.mxu0 %v1525
    %1916 = vmatprep.subr.mxu0 0.0
    %1917 = vmatpush1.msra.mxu0 %v1526
    %1918 = vmatprep.subr.mxu0 0.0
    %1919 = vmatpush1.msra.mxu0 %v1527
    %1920 = vmatprep.subr.mxu0 0.0
    %1921 = vmatpush1.msra.mxu0 0.0
    %1922 = vmatprep.subr.mxu0 0.0
    %1923 = vmatpush1.msra.mxu0 0.0
    %1924 = vmatprep.subr.mxu0 0.0
    %1925 = vmatpush1.msra.mxu0 0.0
    %1926 = vmatprep.subr.mxu0 0.0
    %1927 = vmatpush1.msra.mxu0 0.0
    %1928 = vmatprep.subr.mxu0 0.0
    %1929 = vmatpush1.msra.mxu0 0.0
    %1930 = vmatprep.subr.mxu0 0.0
    %1931 = vmatpush1.msra.mxu0 0.0
    %1932 = vmatprep.subr.mxu0 0.0
    %1933 = vmatpush1.msra.mxu0 0.0
    %1934 = vmatprep.subr.mxu0 0.0
    %1935 = vmatpush1.msra.mxu0 0.0
    %1936 = vmatprep.subr.mxu0 0.0
    %1937 = vmatpush1.msra.mxu0 0.0
    %1938 = vmatprep.subr.mxu0 0.0
    %1939 = vmatpush1.msra.mxu0 0.0
    %1940 = vmatprep.subr.mxu0 0.0
    %1941 = vmatpush1.msra.mxu0 0.0
    %1942 = vmatprep.subr.mxu0 0.0
    %1943 = vmatpush1.msra.mxu0 0.0
    %1944 = vmatprep.subr.mxu0 0.0
    %1945 = vmatpush1.msra.mxu0 0.0
    %1946 = vmatprep.subr.mxu0 0.0
    %1947 = vmatpush1.msra.mxu0 0.0
    %1948 = vmatprep.subr.mxu0 0.0
    %1949 = vmatpush1.msra.mxu0 0.0
    %1950 = vmatprep.subr.mxu0 0.0
    %1951 = vmatpush1.msra.mxu0 0.0
    %1952 = vmatprep.subr.mxu0 0.0
    %1953 = vmatpush1.msra.mxu0 0.0
    %1954 = vmatprep.subr.mxu0 0.0
    %1955 = vmatpush1.msra.mxu0 0.0
    %1956 = vmatprep.subr.mxu0 0.0
    %1957 = vmatpush1.msra.mxu0 0.0
    %1958 = vmatprep.subr.mxu0 0.0
    %1959 = vmatpush1.msra.mxu0 0.0
    %1960 = vmatprep.subr.mxu0 0.0
    %1961 = vmatpush1.msra.mxu0 0.0
    %1962 = vmatprep.subr.mxu0 0.0
    %1963 = vmatpush1.msra.mxu0 0.0
    %1964 = vmatprep.subr.mxu0 0.0
    %1965 = vmatpush1.msra.mxu0 0.0
    %1966 = vmatprep.subr.mxu0 0.0
    %1967 = vmatpush1.msra.mxu0 0.0
    %1968 = vmatprep.subr.mxu0 0.0
    %1969 = vmatpush1.msra.mxu0 0.0
    %1970 = vmatprep.subr.mxu0 0.0
    %1971 = vmatpush1.msra.mxu0 0.0
    %1972 = vmatprep.mubr.f32.mxu0 0.0
    %1973 = vmatmul.mubr.f32.gmra.mrb[0].mxu0 %v1626
    %v1974 = vpop.f32.mrb[0].mxu0
    %v1975 = vadd.f32 %v1599, %v1974
    %v1976 = vpop.f32.mrb[0].mxu0
    %1977 = vdwg.mxu0
    %1978 = vmatprep.subr.mxu0 0.0
    %1979 = vmatpush1.msra.mxu0 %v1528
    %1980 = vmatprep.subr.mxu0 0.0
    %1981 = vmatpush1.msra.mxu0 %v1529
    %1982 = vmatprep.subr.mxu0 0.0
    %1983 = vmatpush1.msra.mxu0 %v1530
    %1984 = vmatprep.subr.mxu0 0.0
    %1985 = vmatpush1.msra.mxu0 %v1531
    %1986 = vmatprep.subr.mxu0 0.0
    %1987 = vmatpush1.msra.mxu0 %v1532
    %1988 = vmatprep.subr.mxu0 0.0
    %1989 = vmatpush1.msra.mxu0 %v1533
    %1990 = vmatprep.subr.mxu0 0.0
    %1991 = vmatpush1.msra.mxu0 0.0
    %1992 = vmatprep.subr.mxu0 0.0
    %1993 = vmatpush1.msra.mxu0 0.0
    %1994 = vmatprep.subr.mxu0 0.0
    %1995 = vmatpush1.msra.mxu0 0.0
    %1996 = vmatprep.subr.mxu0 0.0
    %1997 = vmatpush1.msra.mxu0 0.0
    %1998 = vmatprep.subr.mxu0 0.0
    %1999 = vmatpush1.msra.mxu0 0.0
    %2000 = vmatprep.subr.mxu0 0.0
    %2001 = vmatpush1.msra.mxu0 0.0
    %2002 = vmatprep.subr.mxu0 0.0
    %2003 = vmatpush1.msra.mxu0 0.0
    %2004 = vmatprep.subr.mxu0 0.0
    %2005 = vmatpush1.msra.mxu0 0.0
    %2006 = vmatprep.subr.mxu0 0.0
    %2007 = vmatpush1.msra.mxu0 0.0
    %2008 = vmatprep.subr.mxu0 0.0
    %2009 = vmatpush1.msra.mxu0 0.0
    %2010 = vmatprep.subr.mxu0 0.0
    %2011 = vmatpush1.msra.mxu0 0.0
    %2012 = vmatprep.subr.mxu0 0.0
    %2013 = vmatpush1.msra.mxu0 0.0
    %2014 = vmatprep.subr.mxu0 0.0
    %2015 = vmatpush1.msra.mxu0 0.0
    %2016 = vmatprep.subr.mxu0 0.0
    %2017 = vmatpush1.msra.mxu0 0.0
    %2018 = vmatprep.subr.mxu0 0.0
    %2019 = vmatpush1.msra.mxu0 0.0
    %2020 = vmatprep.subr.mxu0 0.0
    %2021 = vmatpush1.msra.mxu0 0.0
    %2022 = vmatprep.subr.mxu0 0.0
    %2023 = vmatpush1.msra.mxu0 0.0
    %2024 = vmatprep.subr.mxu0 0.0
    %2025 = vmatpush1.msra.mxu0 0.0
    %2026 = vmatprep.subr.mxu0 0.0
    %2027 = vmatpush1.msra.mxu0 0.0
    %2028 = vmatprep.subr.mxu0 0.0
    %2029 = vmatpush1.msra.mxu0 0.0
    %2030 = vmatprep.subr.mxu0 0.0
    %2031 = vmatpush1.msra.mxu0 0.0
    %2032 = vmatprep.subr.mxu0 0.0
    %2033 = vmatpush1.msra.mxu0 0.0
    %2034 = vmatprep.subr.mxu0 0.0
    %2035 = vmatpush1.msra.mxu0 0.0
    %2036 = vmatprep.subr.mxu0 0.0
    %2037 = vmatpush1.msra.mxu0 0.0
    %2038 = vmatprep.subr.mxu0 0.0
    %2039 = vmatpush1.msra.mxu0 0.0
    %2040 = vmatprep.subr.mxu0 0.0
    %2041 = vmatpush1.msra.mxu0 0.0
    %2042 = vmatprep.mubr.f32.mxu0 0.0
    %2043 = vmatmul.mubr.f32.gmra.mrb[0].mxu0 %v1626
    %v2044 = vpop.f32.mrb[0].mxu0
    %v2045 = vadd.f32 %v1603, %v2044
    %v2046 = vpop.f32.mrb[0].mxu0
    %2047 = vdwg.mxu0
    %2048 = vmatprep.subr.mxu0 0.0
    %2049 = vmatpush1.msra.mxu0 %v1534
    %2050 = vmatprep.subr.mxu0 0.0
    %2051 = vmatpush1.msra.mxu0 %v1535
    %2052 = vmatprep.subr.mxu0 0.0
    %2053 = vmatpush1.msra.mxu0 %v1536
    %2054 = vmatprep.subr.mxu0 0.0
    %2055 = vmatpush1.msra.mxu0 %v1537
    %2056 = vmatprep.subr.mxu0 0.0
    %2057 = vmatpush1.msra.mxu0 %v1538
    %2058 = vmatprep.subr.mxu0 0.0
    %2059 = vmatpush1.msra.mxu0 %v1539
    %2060 = vmatprep.subr.mxu0 0.0
    %2061 = vmatpush1.msra.mxu0 0.0
    %2062 = vmatprep.subr.mxu0 0.0
    %2063 = vmatpush1.msra.mxu0 0.0
    %2064 = vmatprep.subr.mxu0 0.0
    %2065 = vmatpush1.msra.mxu0 0.0
    %2066 = vmatprep.subr.mxu0 0.0
    %2067 = vmatpush1.msra.mxu0 0.0
    %2068 = vmatprep.subr.mxu0 0.0
    %2069 = vmatpush1.msra.mxu0 0.0
    %2070 = vmatprep.subr.mxu0 0.0
    %2071 = vmatpush1.msra.mxu0 0.0
    %2072 = vmatprep.subr.mxu0 0.0
    %2073 = vmatpush1.msra.mxu0 0.0
    %2074 = vmatprep.subr.mxu0 0.0
    %2075 = vmatpush1.msra.mxu0 0.0
    %2076 = vmatprep.subr.mxu0 0.0
    %2077 = vmatpush1.msra.mxu0 0.0
    %2078 = vmatprep.subr.mxu0 0.0
    %2079 = vmatpush1.msra.mxu0 0.0
    %2080 = vmatprep.subr.mxu0 0.0
    %2081 = vmatpush1.msra.mxu0 0.0
    %2082 = vmatprep.subr.mxu0 0.0
    %2083 = vmatpush1.msra.mxu0 0.0
    %2084 = vmatprep.subr.mxu0 0.0
    %2085 = vmatpush1.msra.mxu0 0.0
    %2086 = vmatprep.subr.mxu0 0.0
    %2087 = vmatpush1.msra.mxu0 0.0
    %2088 = vmatprep.subr.mxu0 0.0
    %2089 = vmatpush1.msra.mxu0 0.0
    %2090 = vmatprep.subr.mxu0 0.0
    %2091 = vmatpush1.msra.mxu0 0.0
    %2092 = vmatprep.subr.mxu0 0.0
    %2093 = vmatpush1.msra.mxu0 0.0
    %2094 = vmatprep.subr.mxu0 0.0
    %2095 = vmatpush1.msra.mxu0 0.0
    %2096 = vmatprep.subr.mxu0 0.0
    %2097 = vmatpush1.msra.mxu0 0.0
    %2098 = vmatprep.subr.mxu0 0.0
    %2099 = vmatpush1.msra.mxu0 0.0
    %2100 = vmatprep.subr.mxu0 0.0
    %2101 = vmatpush1.msra.mxu0 0.0
    %2102 = vmatprep.subr.mxu0 0.0
    %2103 = vmatpush1.msra.mxu0 0.0
    %2104 = vmatprep.subr.mxu0 0.0
    %2105 = vmatpush1.msra.mxu0 0.0
    %2106 = vmatprep.subr.mxu0 0.0
    %2107 = vmatpush1.msra.mxu0 0.0
    %2108 = vmatprep.subr.mxu0 0.0
    %2109 = vmatpush1.msra.mxu0 0.0
    %2110 = vmatprep.subr.mxu0 0.0
    %2111 = vmatpush1.msra.mxu0 0.0
    %2112 = vmatprep.mubr.f32.mxu0 0.0
    %2113 = vmatmul.mubr.f32.gmra.mrb[0].mxu0 %v1626
    %v2114 = vpop.f32.mrb[0].mxu0
    %v2115 = vadd.f32 %v1607, %v2114
    %v2116 = vpop.f32.mrb[0].mxu0
    %2117 = vdwg.mxu0
    %2118 = vmatprep.subr.mxu0 0.0
    %2119 = vmatpush1.msra.mxu0 %v1540
    %2120 = vmatprep.subr.mxu0 0.0
    %2121 = vmatpush1.msra.mxu0 %v1541
    %2122 = vmatprep.subr.mxu0 0.0
    %2123 = vmatpush1.msra.mxu0 %v1542
    %2124 = vmatprep.subr.mxu0 0.0
    %2125 = vmatpush1.msra.mxu0 %v1543
    %2126 = vmatprep.subr.mxu0 0.0
    %2127 = vmatpush1.msra.mxu0 %v1544
    %2128 = vmatprep.subr.mxu0 0.0
    %2129 = vmatpush1.msra.mxu0 %v1545
    %2130 = vmatprep.subr.mxu0 0.0
    %2131 = vmatpush1.msra.mxu0 0.0
    %2132 = vmatprep.subr.mxu0 0.0
    %2133 = vmatpush1.msra.mxu0 0.0
    %2134 = vmatprep.subr.mxu0 0.0
    %2135 = vmatpush1.msra.mxu0 0.0
    %2136 = vmatprep.subr.mxu0 0.0
    %2137 = vmatpush1.msra.mxu0 0.0
    %2138 = vmatprep.subr.mxu0 0.0
    %2139 = vmatpush1.msra.mxu0 0.0
    %2140 = vmatprep.subr.mxu0 0.0
    %2141 = vmatpush1.msra.mxu0 0.0
    %2142 = vmatprep.subr.mxu0 0.0
    %2143 = vmatpush1.msra.mxu0 0.0
    %2144 = vmatprep.subr.mxu0 0.0
    %2145 = vmatpush1.msra.mxu0 0.0
    %2146 = vmatprep.subr.mxu0 0.0
    %2147 = vmatpush1.msra.mxu0 0.0
    %2148 = vmatprep.subr.mxu0 0.0
    %2149 = vmatpush1.msra.mxu0 0.0
    %2150 = vmatprep.subr.mxu0 0.0
    %2151 = vmatpush1.msra.mxu0 0.0
    %2152 = vmatprep.subr.mxu0 0.0
    %2153 = vmatpush1.msra.mxu0 0.0
    %2154 = vmatprep.subr.mxu0 0.0
    %2155 = vmatpush1.msra.mxu0 0.0
    %2156 = vmatprep.subr.mxu0 0.0
    %2157 = vmatpush1.msra.mxu0 0.0
    %2158 = vmatprep.subr.mxu0 0.0
    %2159 = vmatpush1.msra.mxu0 0.0
    %2160 = vmatprep.subr.mxu0 0.0
    %2161 = vmatpush1.msra.mxu0 0.0
    %2162 = vmatprep.subr.mxu0 0.0
    %2163 = vmatpush1.msra.mxu0 0.0
    %2164 = vmatprep.subr.mxu0 0.0
    %2165 = vmatpush1.msra.mxu0 0.0
    %2166 = vmatprep.subr.mxu0 0.0
    %2167 = vmatpush1.msra.mxu0 0.0
    %2168 = vmatprep.subr.mxu0 0.0
    %2169 = vmatpush1.msra.mxu0 0.0
    %2170 = vmatprep.subr.mxu0 0.0
    %2171 = vmatpush1.msra.mxu0 0.0
    %2172 = vmatprep.subr.mxu0 0.0
    %2173 = vmatpush1.msra.mxu0 0.0
    %2174 = vmatprep.subr.mxu0 0.0
    %2175 = vmatpush1.msra.mxu0 0.0
    %2176 = vmatprep.subr.mxu0 0.0
    %2177 = vmatpush1.msra.mxu0 0.0
    %2178 = vmatprep.subr.mxu0 0.0
    %2179 = vmatpush1.msra.mxu0 0.0
    %2180 = vmatprep.subr.mxu0 0.0
    %2181 = vmatpush1.msra.mxu0 0.0
    %2182 = vmatprep.mubr.f32.mxu0 0.0
    %2183 = vmatmul.mubr.f32.gmra.mrb[0].mxu0 %v1626
    %v2184 = vpop.f32.mrb[0].mxu0
    %v2185 = vadd.f32 %v1611, %v2184
    %v2186 = vpop.f32.mrb[0].mxu0
    %2187 = vdwg.mxu0
    %2188 = vmatprep.subr.mxu0 0.0
    %2189 = vmatpush1.msra.mxu0 %v1546
    %2190 = vmatprep.subr.mxu0 0.0
    %2191 = vmatpush1.msra.mxu0 %v1547
    %2192 = vmatprep.subr.mxu0 0.0
    %2193 = vmatpush1.msra.mxu0 %v1548
    %2194 = vmatprep.subr.mxu0 0.0
    %2195 = vmatpush1.msra.mxu0 %v1549
    %2196 = vmatprep.subr.mxu0 0.0
    %2197 = vmatpush1.msra.mxu0 %v1550
    %2198 = vmatprep.subr.mxu0 0.0
    %2199 = vmatpush1.msra.mxu0 %v1551
    %2200 = vmatprep.subr.mxu0 0.0
    %2201 = vmatpush1.msra.mxu0 0.0
    %2202 = vmatprep.subr.mxu0 0.0
    %2203 = vmatpush1.msra.mxu0 0.0
    %2204 = vmatprep.subr.mxu0 0.0
    %2205 = vmatpush1.msra.mxu0 0.0
    %2206 = vmatprep.subr.mxu0 0.0
    %2207 = vmatpush1.msra.mxu0 0.0
    %2208 = vmatprep.subr.mxu0 0.0
    %2209 = vmatpush1.msra.mxu0 0.0
    %2210 = vmatprep.subr.mxu0 0.0
    %2211 = vmatpush1.msra.mxu0 0.0
    %2212 = vmatprep.subr.mxu0 0.0
    %2213 = vmatpush1.msra.mxu0 0.0
    %2214 = vmatprep.subr.mxu0 0.0
    %2215 = vmatpush1.msra.mxu0 0.0
    %2216 = vmatprep.subr.mxu0 0.0
    %2217 = vmatpush1.msra.mxu0 0.0
    %2218 = vmatprep.subr.mxu0 0.0
    %2219 = vmatpush1.msra.mxu0 0.0
    %2220 = vmatprep.subr.mxu0 0.0
    %2221 = vmatpush1.msra.mxu0 0.0
    %2222 = vmatprep.subr.mxu0 0.0
    %2223 = vmatpush1.msra.mxu0 0.0
    %2224 = vmatprep.subr.mxu0 0.0
    %2225 = vmatpush1.msra.mxu0 0.0
    %2226 = vmatprep.subr.mxu0 0.0
    %2227 = vmatpush1.msra.mxu0 0.0
    %2228 = vmatprep.subr.mxu0 0.0
    %2229 = vmatpush1.msra.mxu0 0.0
    %2230 = vmatprep.subr.mxu0 0.0
    %2231 = vmatpush1.msra.mxu0 0.0
    %2232 = vmatprep.subr.mxu0 0.0
    %2233 = vmatpush1.msra.mxu0 0.0
    %2234 = vmatprep.subr.mxu0 0.0
    %2235 = vmatpush1.msra.mxu0 0.0
    %2236 = vmatprep.subr.mxu0 0.0
    %2237 = vmatpush1.msra.mxu0 0.0
    %2238 = vmatprep.subr.mxu0 0.0
    %2239 = vmatpush1.msra.mxu0 0.0
    %2240 = vmatprep.subr.mxu0 0.0
    %2241 = vmatpush1.msra.mxu0 0.0
    %2242 = vmatprep.subr.mxu0 0.0
    %2243 = vmatpush1.msra.mxu0 0.0
    %2244 = vmatprep.subr.mxu0 0.0
    %2245 = vmatpush1.msra.mxu0 0.0
    %2246 = vmatprep.subr.mxu0 0.0
    %2247 = vmatpush1.msra.mxu0 0.0
    %2248 = vmatprep.subr.mxu0 0.0
    %2249 = vmatpush1.msra.mxu0 0.0
    %2250 = vmatprep.subr.mxu0 0.0
    %2251 = vmatpush1.msra.mxu0 0.0
    %2252 = vmatprep.mubr.f32.mxu0 0.0
    %2253 = vmatmul.mubr.f32.gmra.mrb[0].mxu0 %v1626
    %v2254 = vpop.f32.mrb[0].mxu0
    %v2255 = vadd.f32 %v1615, %v2254
    %v2256 = vpop.f32.mrb[0].mxu0
    %2257 = vdwg.mxu0
    %v2259 = vsel %vm784, %v1695, 0
    %v2262 = vsel %vm784, %v1905, 0
    %2264 = vmatprep.subr.mxu0 0.0
    %2265 = vmatpush1.xpose.msra.mxu0 %v2262
    %2266 = vmatprep.subr.mxu0 0.0
    %2267 = vmatpush1.xpose.msra.mxu0 0.0
    %2268 = vmatprep.subr.mxu0 0.0
    %2269 = vmatpush1.xpose.msra.mxu0 0.0
    %2270 = vmatprep.subr.mxu0 0.0
    %2271 = vmatpush1.xpose.msra.mxu0 0.0
    %2272 = vmatprep.subr.mxu0 0.0
    %2273 = vmatpush1.xpose.msra.mxu0 0.0
    %2274 = vmatprep.subr.mxu0 0.0
    %2275 = vmatpush1.xpose.msra.mxu0 0.0
    %2276 = vmatprep.subr.mxu0 0.0
    %2277 = vmatpush1.xpose.msra.mxu0 0.0
    %2278 = vmatprep.subr.mxu0 0.0
    %2279 = vmatpush1.xpose.msra.mxu0 0.0
    %2280 = vmatprep.subr.mxu0 0.0
    %2281 = vmatpush1.xpose.msra.mxu0 0.0
    %2282 = vmatprep.subr.mxu0 0.0
    %2283 = vmatpush1.xpose.msra.mxu0 0.0
    %2284 = vmatprep.subr.mxu0 0.0
    %2285 = vmatpush1.xpose.msra.mxu0 0.0
    %2286 = vmatprep.subr.mxu0 0.0
    %2287 = vmatpush1.xpose.msra.mxu0 0.0
    %2288 = vmatprep.subr.mxu0 0.0
    %2289 = vmatpush1.xpose.msra.mxu0 0.0
    %2290 = vmatprep.subr.mxu0 0.0
    %2291 = vmatpush1.xpose.msra.mxu0 0.0
    %2292 = vmatprep.subr.mxu0 0.0
    %2293 = vmatpush1.xpose.msra.mxu0 0.0
    %2294 = vmatprep.subr.mxu0 0.0
    %2295 = vmatpush1.xpose.msra.mxu0 0.0
    %2296 = vmatprep.subr.mxu0 0.0
    %2297 = vmatpush1.xpose.msra.mxu0 0.0
    %2298 = vmatprep.subr.mxu0 0.0
    %2299 = vmatpush1.xpose.msra.mxu0 0.0
    %2300 = vmatprep.subr.mxu0 0.0
    %2301 = vmatpush1.xpose.msra.mxu0 0.0
    %2302 = vmatprep.subr.mxu0 0.0
    %2303 = vmatpush1.xpose.msra.mxu0 0.0
    %2304 = vmatprep.subr.mxu0 0.0
    %2305 = vmatpush1.xpose.msra.mxu0 0.0
    %2306 = vmatprep.subr.mxu0 0.0
    %2307 = vmatpush1.xpose.msra.mxu0 0.0
    %2308 = vmatprep.subr.mxu0 0.0
    %2309 = vmatpush1.xpose.msra.mxu0 0.0
    %2310 = vmatprep.subr.mxu0 0.0
    %2311 = vmatpush1.xpose.msra.mxu0 0.0
    %2312 = vmatprep.subr.mxu0 0.0
    %2313 = vmatpush1.xpose.msra.mxu0 0.0
    %2314 = vmatprep.subr.mxu0 0.0
    %2315 = vmatpush1.xpose.msra.mxu0 0.0
    %2316 = vmatprep.subr.mxu0 0.0
    %2317 = vmatpush1.xpose.msra.mxu0 0.0
    %2318 = vmatprep.subr.mxu0 0.0
    %2319 = vmatpush1.xpose.msra.mxu0 0.0
    %2320 = vmatprep.subr.mxu0 0.0
    %2321 = vmatpush1.xpose.msra.mxu0 0.0
    %2322 = vmatprep.subr.mxu0 0.0
    %2323 = vmatpush1.xpose.msra.mxu0 0.0
    %2324 = vmatprep.subr.mxu0 0.0
    %2325 = vmatpush1.xpose.msra.mxu0 0.0
    %2326 = vmatprep.subr.mxu0 0.0
    %2327 = vmatpush1.xpose.msra.mxu0 0.0
    %2328 = vmatprep.mubr.f32.mxu0 0.0
    %2329 = vmatmul.mubr.f32.gmra.mrb[0].mxu0 %v2259
    %v2330 = vpop.f32.mrb[0].mxu0
    %v2331 = vadd.f32 %v25, %v2330
    %v2332 = vpop.f32.mrb[0].mxu0
    %2333 = vdwg.mxu0
    %v2335 = vsel %vm784, %v1765, 0
    %v2338 = vsel %vm784, %v1975, 0
    %2340 = vmatprep.subr.mxu0 0.0
    %2341 = vmatpush1.xpose.msra.mxu0 %v2338
    %2342 = vmatprep.subr.mxu0 0.0
    %2343 = vmatpush1.xpose.msra.mxu0 0.0
    %2344 = vmatprep.subr.mxu0 0.0
    %2345 = vmatpush1.xpose.msra.mxu0 0.0
    %2346 = vmatprep.subr.mxu0 0.0
    %2347 = vmatpush1.xpose.msra.mxu0 0.0
    %2348 = vmatprep.subr.mxu0 0.0
    %2349 = vmatpush1.xpose.msra.mxu0 0.0
    %2350 = vmatprep.subr.mxu0 0.0
    %2351 = vmatpush1.xpose.msra.mxu0 0.0
    %2352 = vmatprep.subr.mxu0 0.0
    %2353 = vmatpush1.xpose.msra.mxu0 0.0
    %2354 = vmatprep.subr.mxu0 0.0
    %2355 = vmatpush1.xpose.msra.mxu0 0.0
    %2356 = vmatprep.subr.mxu0 0.0
    %2357 = vmatpush1.xpose.msra.mxu0 0.0
    %2358 = vmatprep.subr.mxu0 0.0
    %2359 = vmatpush1.xpose.msra.mxu0 0.0
    %2360 = vmatprep.subr.mxu0 0.0
    %2361 = vmatpush1.xpose.msra.mxu0 0.0
    %2362 = vmatprep.subr.mxu0 0.0
    %2363 = vmatpush1.xpose.msra.mxu0 0.0
    %2364 = vmatprep.subr.mxu0 0.0
    %2365 = vmatpush1.xpose.msra.mxu0 0.0
    %2366 = vmatprep.subr.mxu0 0.0
    %2367 = vmatpush1.xpose.msra.mxu0 0.0
    %2368 = vmatprep.subr.mxu0 0.0
    %2369 = vmatpush1.xpose.msra.mxu0 0.0
    %2370 = vmatprep.subr.mxu0 0.0
    %2371 = vmatpush1.xpose.msra.mxu0 0.0
    %2372 = vmatprep.subr.mxu0 0.0
    %2373 = vmatpush1.xpose.msra.mxu0 0.0
    %2374 = vmatprep.subr.mxu0 0.0
    %2375 = vmatpush1.xpose.msra.mxu0 0.0
    %2376 = vmatprep.subr.mxu0 0.0
    %2377 = vmatpush1.xpose.msra.mxu0 0.0
    %2378 = vmatprep.subr.mxu0 0.0
    %2379 = vmatpush1.xpose.msra.mxu0 0.0
    %2380 = vmatprep.subr.mxu0 0.0
    %2381 = vmatpush1.xpose.msra.mxu0 0.0
    %2382 = vmatprep.subr.mxu0 0.0
    %2383 = vmatpush1.xpose.msra.mxu0 0.0
    %2384 = vmatprep.subr.mxu0 0.0
    %2385 = vmatpush1.xpose.msra.mxu0 0.0
    %2386 = vmatprep.subr.mxu0 0.0
    %2387 = vmatpush1.xpose.msra.mxu0 0.0
    %2388 = vmatprep.subr.mxu0 0.0
    %2389 = vmatpush1.xpose.msra.mxu0 0.0
    %2390 = vmatprep.subr.mxu0 0.0
    %2391 = vmatpush1.xpose.msra.mxu0 0.0
    %2392 = vmatprep.subr.mxu0 0.0
    %2393 = vmatpush1.xpose.msra.mxu0 0.0
    %2394 = vmatprep.subr.mxu0 0.0
    %2395 = vmatpush1.xpose.msra.mxu0 0.0
    %2396 = vmatprep.subr.mxu0 0.0
    %2397 = vmatpush1.xpose.msra.mxu0 0.0
    %2398 = vmatprep.subr.mxu0 0.0
    %2399 = vmatpush1.xpose.msra.mxu0 0.0
    %2400 = vmatprep.subr.mxu0 0.0
    %2401 = vmatpush1.xpose.msra.mxu0 0.0
    %2402 = vmatprep.subr.mxu0 0.0
    %2403 = vmatpush1.xpose.msra.mxu0 0.0
    %2404 = vmatprep.mubr.f32.mxu0 0.0
    %2405 = vmatmul.mubr.f32.gmra.mrb[0].mxu0 %v2335
    %v2406 = vpop.f32.mrb[0].mxu0
    %v2407 = vadd.f32 %v25, %v2406
    %v2408 = vpop.f32.mrb[0].mxu0
    %2409 = vdwg.mxu0
    %v2411 = vsel %vm784, %v1835, 0
    %v2414 = vsel %vm784, %v2045, 0
    %2416 = vmatprep.subr.mxu0 0.0
    %2417 = vmatpush1.xpose.msra.mxu0 %v2414
    %2418 = vmatprep.subr.mxu0 0.0
    %2419 = vmatpush1.xpose.msra.mxu0 0.0
    %2420 = vmatprep.subr.mxu0 0.0
    %2421 = vmatpush1.xpose.msra.mxu0 0.0
    %2422 = vmatprep.subr.mxu0 0.0
    %2423 = vmatpush1.xpose.msra.mxu0 0.0
    %2424 = vmatprep.subr.mxu0 0.0
    %2425 = vmatpush1.xpose.msra.mxu0 0.0
    %2426 = vmatprep.subr.mxu0 0.0
    %2427 = vmatpush1.xpose.msra.mxu0 0.0
    %2428 = vmatprep.subr.mxu0 0.0
    %2429 = vmatpush1.xpose.msra.mxu0 0.0
    %2430 = vmatprep.subr.mxu0 0.0
    %2431 = vmatpush1.xpose.msra.mxu0 0.0
    %2432 = vmatprep.subr.mxu0 0.0
    %2433 = vmatpush1.xpose.msra.mxu0 0.0
    %2434 = vmatprep.subr.mxu0 0.0
    %2435 = vmatpush1.xpose.msra.mxu0 0.0
    %2436 = vmatprep.subr.mxu0 0.0
    %2437 = vmatpush1.xpose.msra.mxu0 0.0
    %2438 = vmatprep.subr.mxu0 0.0
    %2439 = vmatpush1.xpose.msra.mxu0 0.0
    %2440 = vmatprep.subr.mxu0 0.0
    %2441 = vmatpush1.xpose.msra.mxu0 0.0
    %2442 = vmatprep.subr.mxu0 0.0
    %2443 = vmatpush1.xpose.msra.mxu0 0.0
    %2444 = vmatprep.subr.mxu0 0.0
    %2445 = vmatpush1.xpose.msra.mxu0 0.0
    %2446 = vmatprep.subr.mxu0 0.0
    %2447 = vmatpush1.xpose.msra.mxu0 0.0
    %2448 = vmatprep.subr.mxu0 0.0
    %2449 = vmatpush1.xpose.msra.mxu0 0.0
    %2450 = vmatprep.subr.mxu0 0.0
    %2451 = vmatpush1.xpose.msra.mxu0 0.0
    %2452 = vmatprep.subr.mxu0 0.0
    %2453 = vmatpush1.xpose.msra.mxu0 0.0
    %2454 = vmatprep.subr.mxu0 0.0
    %2455 = vmatpush1.xpose.msra.mxu0 0.0
    %2456 = vmatprep.subr.mxu0 0.0
    %2457 = vmatpush1.xpose.msra.mxu0 0.0
    %2458 = vmatprep.subr.mxu0 0.0
    %2459 = vmatpush1.xpose.msra.mxu0 0.0
    %2460 = vmatprep.subr.mxu0 0.0
    %2461 = vmatpush1.xpose.msra.mxu0 0.0
    %2462 = vmatprep.subr.mxu0 0.0
    %2463 = vmatpush1.xpose.msra.mxu0 0.0
    %2464 = vmatprep.subr.mxu0 0.0
    %2465 = vmatpush1.xpose.msra.mxu0 0.0
    %2466 = vmatprep.subr.mxu0 0.0
    %2467 = vmatpush1.xpose.msra.mxu0 0.0
    %2468 = vmatprep.subr.mxu0 0.0
    %2469 = vmatpush1.xpose.msra.mxu0 0.0
    %2470 = vmatprep.subr.mxu0 0.0
    %2471 = vmatpush1.xpose.msra.mxu0 0.0
    %2472 = vmatprep.subr.mxu0 0.0
    %2473 = vmatpush1.xpose.msra.mxu0 0.0
    %2474 = vmatprep.subr.mxu0 0.0
    %2475 = vmatpush1.xpose.msra.mxu0 0.0
    %2476 = vmatprep.subr.mxu0 0.0
    %2477 = vmatpush1.xpose.msra.mxu0 0.0
    %2478 = vmatprep.subr.mxu0 0.0
    %2479 = vmatpush1.xpose.msra.mxu0 0.0
    %2480 = vmatprep.mubr.f32.mxu0 0.0
    %2481 = vmatmul.mubr.f32.gmra.mrb[0].mxu0 %v2411
    %v2482 = vpop.f32.mrb[0].mxu0
    %v2483 = vadd.f32 %v25, %v2482
    %v2484 = vpop.f32.mrb[0].mxu0
    %2485 = vdwg.mxu0
    %v2486 = vsel %vm1013, %v2331, -inf
    %2487 = vmax.xlane.f32.xlu0 %v2486
    %v2488 = vpop.xlane.xlu0 %2487
    %v2489 = vsel %vm1013, %v2407, -inf
    %2490 = vmax.xlane.f32.xlu0 %v2489
    %v2491 = vpop.xlane.xlu0 %2490
    %v2492 = vsel %vm1013, %v2483, -inf
    %2493 = vmax.xlane.f32.xlu0 %v2492
    %v2494 = vpop.xlane.xlu0 %2493
    %v2495 = vsub.f32 %v2331, %v2488
    %v2496 = vsub.f32 %v2407, %v2491
    %v2497 = vsub.f32 %v2483, %v2494
    %v2498 = vmul.f32 %v2495, 1.442695
    %v2499 = vpow.pop %v2498
    %v2500 = vmul.f32 %v2496, 1.442695
    %v2501 = vpow.pop %v2500
    %v2502 = vmul.f32 %v2497, 1.442695
    %v2503 = vpow.pop %v2502
    %v2504 = vsel %vm1013, %v2499, 0.0
    %2505 = vadd.xlane.f32.xlu0 %v2504
    %v2506 = vpop.xlane.xlu0 %2505
    %v2507 = vsel %vm1013, %v2501, 0.0
    %2508 = vadd.xlane.f32.xlu0 %v2507
    %v2509 = vpop.xlane.xlu0 %2508
    %v2510 = vsel %vm1013, %v2503, 0.0
    %2511 = vadd.xlane.f32.xlu0 %v2510
    %v2512 = vpop.xlane.xlu0 %2511
    %v2513 = vrcp.pop %v2506
    %v2514 = vrcp.pop %v2509
    %v2515 = vrcp.pop %v2512
    %v2516 = vmul.f32 %v2499, %v2513
    %v2517 = vmul.f32 %v2501, %v2514
    %v2518 = vmul.f32 %v2503, %v2515
    %v2520 = vsel %vm1013, %v2516, 0
    %2522 = vmatprep.subr.mxu0 0.0
    %2523 = vmatpush1.msra.mxu0 %v2115
    %2524 = vmatprep.subr.mxu0 0.0
    %2525 = vmatpush1.msra.mxu0 0.0
    %2526 = vmatprep.subr.mxu0 0.0
    %2527 = vmatpush1.msra.mxu0 0.0
    %2528 = vmatprep.subr.mxu0 0.0
    %2529 = vmatpush1.msra.mxu0 0.0
    %2530 = vmatprep.subr.mxu0 0.0
    %2531 = vmatpush1.msra.mxu0 0.0
    %2532 = vmatprep.subr.mxu0 0.0
    %2533 = vmatpush1.msra.mxu0 0.0
    %2534 = vmatprep.subr.mxu0 0.0
    %2535 = vmatpush1.msra.mxu0 0.0
    %2536 = vmatprep.subr.mxu0 0.0
    %2537 = vmatpush1.msra.mxu0 0.0
    %2538 = vmatprep.subr.mxu0 0.0
    %2539 = vmatpush1.msra.mxu0 0.0
    %2540 = vmatprep.subr.mxu0 0.0
    %2541 = vmatpush1.msra.mxu0 0.0
    %2542 = vmatprep.subr.mxu0 0.0
    %2543 = vmatpush1.msra.mxu0 0.0
    %2544 = vmatprep.subr.mxu0 0.0
    %2545 = vmatpush1.msra.mxu0 0.0
    %2546 = vmatprep.subr.mxu0 0.0
    %2547 = vmatpush1.msra.mxu0 0.0
    %2548 = vmatprep.subr.mxu0 0.0
    %2549 = vmatpush1.msra.mxu0 0.0
    %2550 = vmatprep.subr.mxu0 0.0
    %2551 = vmatpush1.msra.mxu0 0.0
    %2552 = vmatprep.subr.mxu0 0.0
    %2553 = vmatpush1.msra.mxu0 0.0
    %2554 = vmatprep.subr.mxu0 0.0
    %2555 = vmatpush1.msra.mxu0 0.0
    %2556 = vmatprep.subr.mxu0 0.0
    %2557 = vmatpush1.msra.mxu0 0.0
    %2558 = vmatprep.subr.mxu0 0.0
    %2559 = vmatpush1.msra.mxu0 0.0
    %2560 = vmatprep.subr.mxu0 0.0
    %2561 = vmatpush1.msra.mxu0 0.0
    %2562 = vmatprep.subr.mxu0 0.0
    %2563 = vmatpush1.msra.mxu0 0.0
    %2564 = vmatprep.subr.mxu0 0.0
    %2565 = vmatpush1.msra.mxu0 0.0
    %2566 = vmatprep.subr.mxu0 0.0
    %2567 = vmatpush1.msra.mxu0 0.0
    %2568 = vmatprep.subr.mxu0 0.0
    %2569 = vmatpush1.msra.mxu0 0.0
    %2570 = vmatprep.subr.mxu0 0.0
    %2571 = vmatpush1.msra.mxu0 0.0
    %2572 = vmatprep.subr.mxu0 0.0
    %2573 = vmatpush1.msra.mxu0 0.0
    %2574 = vmatprep.subr.mxu0 0.0
    %2575 = vmatpush1.msra.mxu0 0.0
    %2576 = vmatprep.subr.mxu0 0.0
    %2577 = vmatpush1.msra.mxu0 0.0
    %2578 = vmatprep.subr.mxu0 0.0
    %2579 = vmatpush1.msra.mxu0 0.0
    %2580 = vmatprep.subr.mxu0 0.0
    %2581 = vmatpush1.msra.mxu0 0.0
    %2582 = vmatprep.subr.mxu0 0.0
    %2583 = vmatpush1.msra.mxu0 0.0
    %2584 = vmatprep.subr.mxu0 0.0
    %2585 = vmatpush1.msra.mxu0 0.0
    %2586 = vmatprep.mubr.f32.mxu0 0.0
    %2587 = vmatmul.mubr.f32.gmra.mrb[0].mxu0 %v2520
    %v2588 = vpop.f32.mrb[0].mxu0
    %v2589 = vadd.f32 0.0, %v2588
    %v2590 = vpop.f32.mrb[0].mxu0
    %2591 = vdwg.mxu0
    %v2593 = vsel %vm1013, %v2517, 0
    %2595 = vmatprep.subr.mxu0 0.0
    %2596 = vmatpush1.msra.mxu0 %v2185
    %2597 = vmatprep.subr.mxu0 0.0
    %2598 = vmatpush1.msra.mxu0 0.0
    %2599 = vmatprep.subr.mxu0 0.0
    %2600 = vmatpush1.msra.mxu0 0.0
    %2601 = vmatprep.subr.mxu0 0.0
    %2602 = vmatpush1.msra.mxu0 0.0
    %2603 = vmatprep.subr.mxu0 0.0
    %2604 = vmatpush1.msra.mxu0 0.0
    %2605 = vmatprep.subr.mxu0 0.0
    %2606 = vmatpush1.msra.mxu0 0.0
    %2607 = vmatprep.subr.mxu0 0.0
    %2608 = vmatpush1.msra.mxu0 0.0
    %2609 = vmatprep.subr.mxu0 0.0
    %2610 = vmatpush1.msra.mxu0 0.0
    %2611 = vmatprep.subr.mxu0 0.0
    %2612 = vmatpush1.msra.mxu0 0.0
    %2613 = vmatprep.subr.mxu0 0.0
    %2614 = vmatpush1.msra.mxu0 0.0
    %2615 = vmatprep.subr.mxu0 0.0
    %2616 = vmatpush1.msra.mxu0 0.0
    %2617 = vmatprep.subr.mxu0 0.0
    %2618 = vmatpush1.msra.mxu0 0.0
    %2619 = vmatprep.subr.mxu0 0.0
    %2620 = vmatpush1.msra.mxu0 0.0
    %2621 = vmatprep.subr.mxu0 0.0
    %2622 = vmatpush1.msra.mxu0 0.0
    %2623 = vmatprep.subr.mxu0 0.0
    %2624 = vmatpush1.msra.mxu0 0.0
    %2625 = vmatprep.subr.mxu0 0.0
    %2626 = vmatpush1.msra.mxu0 0.0
    %2627 = vmatprep.subr.mxu0 0.0
    %2628 = vmatpush1.msra.mxu0 0.0
    %2629 = vmatprep.subr.mxu0 0.0
    %2630 = vmatpush1.msra.mxu0 0.0
    %2631 = vmatprep.subr.mxu0 0.0
    %2632 = vmatpush1.msra.mxu0 0.0
    %2633 = vmatprep.subr.mxu0 0.0
    %2634 = vmatpush1.msra.mxu0 0.0
    %2635 = vmatprep.subr.mxu0 0.0
    %2636 = vmatpush1.msra.mxu0 0.0
    %2637 = vmatprep.subr.mxu0 0.0
    %2638 = vmatpush1.msra.mxu0 0.0
    %2639 = vmatprep.subr.mxu0 0.0
    %2640 = vmatpush1.msra.mxu0 0.0
    %2641 = vmatprep.subr.mxu0 0.0
    %2642 = vmatpush1.msra.mxu0 0.0
    %2643 = vmatprep.subr.mxu0 0.0
    %2644 = vmatpush1.msra.mxu0 0.0
    %2645 = vmatprep.subr.mxu0 0.0
    %2646 = vmatpush1.msra.mxu0 0.0
    %2647 = vmatprep.subr.mxu0 0.0
    %2648 = vmatpush1.msra.mxu0 0.0
    %2649 = vmatprep.subr.mxu0 0.0
    %2650 = vmatpush1.msra.mxu0 0.0
    %2651 = vmatprep.subr.mxu0 0.0
    %2652 = vmatpush1.msra.mxu0 0.0
    %2653 = vmatprep.subr.mxu0 0.0
    %2654 = vmatpush1.msra.mxu0 0.0
    %2655 = vmatprep.subr.mxu0 0.0
    %2656 = vmatpush1.msra.mxu0 0.0
    %2657 = vmatprep.subr.mxu0 0.0
    %2658 = vmatpush1.msra.mxu0 0.0
    %2659 = vmatprep.mubr.f32.mxu0 0.0
    %2660 = vmatmul.mubr.f32.gmra.mrb[0].mxu0 %v2593
    %v2661 = vpop.f32.mrb[0].mxu0
    %v2662 = vadd.f32 0.0, %v2661
    %v2663 = vpop.f32.mrb[0].mxu0
    %2664 = vdwg.mxu0
    %v2666 = vsel %vm1013, %v2518, 0
    %2668 = vmatprep.subr.mxu0 0.0
    %2669 = vmatpush1.msra.mxu0 %v2255
    %2670 = vmatprep.subr.mxu0 0.0
    %2671 = vmatpush1.msra.mxu0 0.0
    %2672 = vmatprep.subr.mxu0 0.0
    %2673 = vmatpush1.msra.mxu0 0.0
    %2674 = vmatprep.subr.mxu0 0.0
    %2675 = vmatpush1.msra.mxu0 0.0
    %2676 = vmatprep.subr.mxu0 0.0
    %2677 = vmatpush1.msra.mxu0 0.0
    %2678 = vmatprep.subr.mxu0 0.0
    %2679 = vmatpush1.msra.mxu0 0.0
    %2680 = vmatprep.subr.mxu0 0.0
    %2681 = vmatpush1.msra.mxu0 0.0
    %2682 = vmatprep.subr.mxu0 0.0
    %2683 = vmatpush1.msra.mxu0 0.0
    %2684 = vmatprep.subr.mxu0 0.0
    %2685 = vmatpush1.msra.mxu0 0.0
    %2686 = vmatprep.subr.mxu0 0.0
    %2687 = vmatpush1.msra.mxu0 0.0
    %2688 = vmatprep.subr.mxu0 0.0
    %2689 = vmatpush1.msra.mxu0 0.0
    %2690 = vmatprep.subr.mxu0 0.0
    %2691 = vmatpush1.msra.mxu0 0.0
    %2692 = vmatprep.subr.mxu0 0.0
    %2693 = vmatpush1.msra.mxu0 0.0
    %2694 = vmatprep.subr.mxu0 0.0
    %2695 = vmatpush1.msra.mxu0 0.0
    %2696 = vmatprep.subr.mxu0 0.0
    %2697 = vmatpush1.msra.mxu0 0.0
    %2698 = vmatprep.subr.mxu0 0.0
    %2699 = vmatpush1.msra.mxu0 0.0
    %2700 = vmatprep.subr.mxu0 0.0
    %2701 = vmatpush1.msra.mxu0 0.0
    %2702 = vmatprep.subr.mxu0 0.0
    %2703 = vmatpush1.msra.mxu0 0.0
    %2704 = vmatprep.subr.mxu0 0.0
    %2705 = vmatpush1.msra.mxu0 0.0
    %2706 = vmatprep.subr.mxu0 0.0
    %2707 = vmatpush1.msra.mxu0 0.0
    %2708 = vmatprep.subr.mxu0 0.0
    %2709 = vmatpush1.msra.mxu0 0.0
    %2710 = vmatprep.subr.mxu0 0.0
    %2711 = vmatpush1.msra.mxu0 0.0
    %2712 = vmatprep.subr.mxu0 0.0
    %2713 = vmatpush1.msra.mxu0 0.0
    %2714 = vmatprep.subr.mxu0 0.0
    %2715 = vmatpush1.msra.mxu0 0.0
    %2716 = vmatprep.subr.mxu0 0.0
    %2717 = vmatpush1.msra.mxu0 0.0
    %2718 = vmatprep.subr.mxu0 0.0
    %2719 = vmatpush1.msra.mxu0 0.0
    %2720 = vmatprep.subr.mxu0 0.0
    %2721 = vmatpush1.msra.mxu0 0.0
    %2722 = vmatprep.subr.mxu0 0.0
    %2723 = vmatpush1.msra.mxu0 0.0
    %2724 = vmatprep.subr.mxu0 0.0
    %2725 = vmatpush1.msra.mxu0 0.0
    %2726 = vmatprep.subr.mxu0 0.0
    %2727 = vmatpush1.msra.mxu0 0.0
    %2728 = vmatprep.subr.mxu0 0.0
    %2729 = vmatpush1.msra.mxu0 0.0
    %2730 = vmatprep.subr.mxu0 0.0
    %2731 = vmatpush1.msra.mxu0 0.0
    %2732 = vmatprep.mubr.f32.mxu0 0.0
    %2733 = vmatmul.mubr.f32.gmra.mrb[0].mxu0 %v2666
    %v2734 = vpop.f32.mrb[0].mxu0
    %v2735 = vadd.f32 0.0, %v2734
    %v2736 = vpop.f32.mrb[0].mxu0
    %2737 = vdwg.mxu0
    %v2739 = vsel %vm784, %v2589, 0
    %2741 = vmatprep.subr.mxu0 0.0
    %2742 = vmatpush1.msra.mxu0 %v1563
    %2743 = vmatprep.subr.mxu0 0.0
    %2744 = vmatpush1.msra.mxu0 %v1564
    %2745 = vmatprep.subr.mxu0 0.0
    %2746 = vmatpush1.msra.mxu0 0.0
    %2747 = vmatprep.subr.mxu0 0.0
    %2748 = vmatpush1.msra.mxu0 0.0
    %2749 = vmatprep.subr.mxu0 0.0
    %2750 = vmatpush1.msra.mxu0 0.0
    %2751 = vmatprep.subr.mxu0 0.0
    %2752 = vmatpush1.msra.mxu0 0.0
    %2753 = vmatprep.subr.mxu0 0.0
    %2754 = vmatpush1.msra.mxu0 0.0
    %2755 = vmatprep.subr.mxu0 0.0
    %2756 = vmatpush1.msra.mxu0 0.0
    %2757 = vmatprep.subr.mxu0 0.0
    %2758 = vmatpush1.msra.mxu0 0.0
    %2759 = vmatprep.subr.mxu0 0.0
    %2760 = vmatpush1.msra.mxu0 0.0
    %2761 = vmatprep.subr.mxu0 0.0
    %2762 = vmatpush1.msra.mxu0 0.0
    %2763 = vmatprep.subr.mxu0 0.0
    %2764 = vmatpush1.msra.mxu0 0.0
    %2765 = vmatprep.subr.mxu0 0.0
    %2766 = vmatpush1.msra.mxu0 0.0
    %2767 = vmatprep.subr.mxu0 0.0
    %2768 = vmatpush1.msra.mxu0 0.0
    %2769 = vmatprep.subr.mxu0 0.0
    %2770 = vmatpush1.msra.mxu0 0.0
    %2771 = vmatprep.subr.mxu0 0.0
    %2772 = vmatpush1.msra.mxu0 0.0
    %2773 = vmatprep.subr.mxu0 0.0
    %2774 = vmatpush1.msra.mxu0 0.0
    %2775 = vmatprep.subr.mxu0 0.0
    %2776 = vmatpush1.msra.mxu0 0.0
    %2777 = vmatprep.subr.mxu0 0.0
    %2778 = vmatpush1.msra.mxu0 0.0
    %2779 = vmatprep.subr.mxu0 0.0
    %2780 = vmatpush1.msra.mxu0 0.0
    %2781 = vmatprep.subr.mxu0 0.0
    %2782 = vmatpush1.msra.mxu0 0.0
    %2783 = vmatprep.subr.mxu0 0.0
    %2784 = vmatpush1.msra.mxu0 0.0
    %2785 = vmatprep.subr.mxu0 0.0
    %2786 = vmatpush1.msra.mxu0 0.0
    %2787 = vmatprep.subr.mxu0 0.0
    %2788 = vmatpush1.msra.mxu0 0.0
    %2789 = vmatprep.subr.mxu0 0.0
    %2790 = vmatpush1.msra.mxu0 0.0
    %2791 = vmatprep.subr.mxu0 0.0
    %2792 = vmatpush1.msra.mxu0 0.0
    %2793 = vmatprep.subr.mxu0 0.0
    %2794 = vmatpush1.msra.mxu0 0.0
    %2795 = vmatprep.subr.mxu0 0.0
    %2796 = vmatpush1.msra.mxu0 0.0
    %2797 = vmatprep.subr.mxu0 0.0
    %2798 = vmatpush1.msra.mxu0 0.0
    %2799 = vmatprep.subr.mxu0 0.0
    %2800 = vmatpush1.msra.mxu0 0.0
    %2801 = vmatprep.subr.mxu0 0.0
    %2802 = vmatpush1.msra.mxu0 0.0
    %2803 = vmatprep.subr.mxu0 0.0
    %2804 = vmatpush1.msra.mxu0 0.0
    %2805 = vmatprep.mubr.f32.mxu0 0.0
    %2806 = vmatmul.mubr.f32.gmra.mrb[0].mxu0 %v2739
    %v2807 = vpop.f32.mrb[0].mxu0
    %v2808 = vadd.f32 0.0, %v2807
    %v2809 = vpop.f32.mrb[0].mxu0
    %2810 = vdwg.mxu0
    %v2812 = vsel %vm784, %v2662, 0
    %2814 = vmatprep.subr.mxu0 0.0
    %2815 = vmatpush1.msra.mxu0 %v1565
    %2816 = vmatprep.subr.mxu0 0.0
    %2817 = vmatpush1.msra.mxu0 %v1566
    %2818 = vmatprep.subr.mxu0 0.0
    %2819 = vmatpush1.msra.mxu0 0.0
    %2820 = vmatprep.subr.mxu0 0.0
    %2821 = vmatpush1.msra.mxu0 0.0
    %2822 = vmatprep.subr.mxu0 0.0
    %2823 = vmatpush1.msra.mxu0 0.0
    %2824 = vmatprep.subr.mxu0 0.0
    %2825 = vmatpush1.msra.mxu0 0.0
    %2826 = vmatprep.subr.mxu0 0.0
    %2827 = vmatpush1.msra.mxu0 0.0
    %2828 = vmatprep.subr.mxu0 0.0
    %2829 = vmatpush1.msra.mxu0 0.0
    %2830 = vmatprep.subr.mxu0 0.0
    %2831 = vmatpush1.msra.mxu0 0.0
    %2832 = vmatprep.subr.mxu0 0.0
    %2833 = vmatpush1.msra.mxu0 0.0
    %2834 = vmatprep.subr.mxu0 0.0
    %2835 = vmatpush1.msra.mxu0 0.0
    %2836 = vmatprep.subr.mxu0 0.0
    %2837 = vmatpush1.msra.mxu0 0.0
    %2838 = vmatprep.subr.mxu0 0.0
    %2839 = vmatpush1.msra.mxu0 0.0
    %2840 = vmatprep.subr.mxu0 0.0
    %2841 = vmatpush1.msra.mxu0 0.0
    %2842 = vmatprep.subr.mxu0 0.0
    %2843 = vmatpush1.msra.mxu0 0.0
    %2844 = vmatprep.subr.mxu0 0.0
    %2845 = vmatpush1.msra.mxu0 0.0
    %2846 = vmatprep.subr.mxu0 0.0
    %2847 = vmatpush1.msra.mxu0 0.0
    %2848 = vmatprep.subr.mxu0 0.0
    %2849 = vmatpush1.msra.mxu0 0.0
    %2850 = vmatprep.subr.mxu0 0.0
    %2851 = vmatpush1.msra.mxu0 0.0
    %2852 = vmatprep.subr.mxu0 0.0
    %2853 = vmatpush1.msra.mxu0 0.0
    %2854 = vmatprep.subr.mxu0 0.0
    %2855 = vmatpush1.msra.mxu0 0.0
    %2856 = vmatprep.subr.mxu0 0.0
    %2857 = vmatpush1.msra.mxu0 0.0
    %2858 = vmatprep.subr.mxu0 0.0
    %2859 = vmatpush1.msra.mxu0 0.0
    %2860 = vmatprep.subr.mxu0 0.0
    %2861 = vmatpush1.msra.mxu0 0.0
    %2862 = vmatprep.subr.mxu0 0.0
    %2863 = vmatpush1.msra.mxu0 0.0
    %2864 = vmatprep.subr.mxu0 0.0
    %2865 = vmatpush1.msra.mxu0 0.0
    %2866 = vmatprep.subr.mxu0 0.0
    %2867 = vmatpush1.msra.mxu0 0.0
    %2868 = vmatprep.subr.mxu0 0.0
    %2869 = vmatpush1.msra.mxu0 0.0
    %2870 = vmatprep.subr.mxu0 0.0
    %2871 = vmatpush1.msra.mxu0 0.0
    %2872 = vmatprep.subr.mxu0 0.0
    %2873 = vmatpush1.msra.mxu0 0.0
    %2874 = vmatprep.subr.mxu0 0.0
    %2875 = vmatpush1.msra.mxu0 0.0
    %2876 = vmatprep.subr.mxu0 0.0
    %2877 = vmatpush1.msra.mxu0 0.0
    %2878 = vmatprep.mubr.f32.mxu0 0.0
    %2879 = vmatmul.mubr.f32.gmra.mrb[0].mxu0 %v2812
    %v2880 = vpop.f32.mrb[0].mxu0
    %v2881 = vadd.f32 0.0, %v2880
    %v2882 = vpop.f32.mrb[0].mxu0
    %2883 = vdwg.mxu0
    %v2885 = vsel %vm784, %v2735, 0
    %2887 = vmatprep.subr.mxu0 0.0
    %2888 = vmatpush1.msra.mxu0 %v1567
    %2889 = vmatprep.subr.mxu0 0.0
    %2890 = vmatpush1.msra.mxu0 %v1568
    %2891 = vmatprep.subr.mxu0 0.0
    %2892 = vmatpush1.msra.mxu0 0.0
    %2893 = vmatprep.subr.mxu0 0.0
    %2894 = vmatpush1.msra.mxu0 0.0
    %2895 = vmatprep.subr.mxu0 0.0
    %2896 = vmatpush1.msra.mxu0 0.0
    %2897 = vmatprep.subr.mxu0 0.0
    %2898 = vmatpush1.msra.mxu0 0.0
    %2899 = vmatprep.subr.mxu0 0.0
    %2900 = vmatpush1.msra.mxu0 0.0
    %2901 = vmatprep.subr.mxu0 0.0
    %2902 = vmatpush1.msra.mxu0 0.0
    %2903 = vmatprep.subr.mxu0 0.0
    %2904 = vmatpush1.msra.mxu0 0.0
    %2905 = vmatprep.subr.mxu0 0.0
    %2906 = vmatpush1.msra.mxu0 0.0
    %2907 = vmatprep.subr.mxu0 0.0
    %2908 = vmatpush1.msra.mxu0 0.0
    %2909 = vmatprep.subr.mxu0 0.0
    %2910 = vmatpush1.msra.mxu0 0.0
    %2911 = vmatprep.subr.mxu0 0.0
    %2912 = vmatpush1.msra.mxu0 0.0
    %2913 = vmatprep.subr.mxu0 0.0
    %2914 = vmatpush1.msra.mxu0 0.0
    %2915 = vmatprep.subr.mxu0 0.0
    %2916 = vmatpush1.msra.mxu0 0.0
    %2917 = vmatprep.subr.mxu0 0.0
    %2918 = vmatpush1.msra.mxu0 0.0
    %2919 = vmatprep.subr.mxu0 0.0
    %2920 = vmatpush1.msra.mxu0 0.0
    %2921 = vmatprep.subr.mxu0 0.0
    %2922 = vmatpush1.msra.mxu0 0.0
    %2923 = vmatprep.subr.mxu0 0.0
    %2924 = vmatpush1.msra.mxu0 0.0
    %2925 = vmatprep.subr.mxu0 0.0
    %2926 = vmatpush1.msra.mxu0 0.0
    %2927 = vmatprep.subr.mxu0 0.0
    %2928 = vmatpush1.msra.mxu0 0.0
    %2929 = vmatprep.subr.mxu0 0.0
    %2930 = vmatpush1.msra.mxu0 0.0
    %2931 = vmatprep.subr.mxu0 0.0
    %2932 = vmatpush1.msra.mxu0 0.0
    %2933 = vmatprep.subr.mxu0 0.0
    %2934 = vmatpush1.msra.mxu0 0.0
    %2935 = vmatprep.subr.mxu0 0.0
    %2936 = vmatpush1.msra.mxu0 0.0
    %2937 = vmatprep.subr.mxu0 0.0
    %2938 = vmatpush1.msra.mxu0 0.0
    %2939 = vmatprep.subr.mxu0 0.0
    %2940 = vmatpush1.msra.mxu0 0.0
    %2941 = vmatprep.subr.mxu0 0.0
    %2942 = vmatpush1.msra.mxu0 0.0
    %2943 = vmatprep.subr.mxu0 0.0
    %2944 = vmatpush1.msra.mxu0 0.0
    %2945 = vmatprep.subr.mxu0 0.0
    %2946 = vmatpush1.msra.mxu0 0.0
    %2947 = vmatprep.subr.mxu0 0.0
    %2948 = vmatpush1.msra.mxu0 0.0
    %2949 = vmatprep.subr.mxu0 0.0
    %2950 = vmatpush1.msra.mxu0 0.0
    %2951 = vmatprep.mubr.f32.mxu0 0.0
    %2952 = vmatmul.mubr.f32.gmra.mrb[0].mxu0 %v2885
    %v2953 = vpop.f32.mrb[0].mxu0
    %v2954 = vadd.f32 0.0, %v2953
    %v2955 = vpop.f32.mrb[0].mxu0
    %2956 = vdwg.mxu0
    %v2957 = vsel %vm150, %v2808, 0.0
    %v2958 = vsel %vm150, %v2881, 0.0
    %v2959 = vadd.f32 %v2957, %v2958
    %v2960 = vsel %vm150, %v2954, 0.0
    %v2961 = vadd.f32 %v2959, %v2960
    %v2963 = vlaneseq
    %v2964 = vshrl.u32 %v2963, 7
    %v2965 = vsub.s32 0, %v2964
    %v2966 = vrot.slane %v1570, %v2965
    %v2968 = vadd.f32 %v2961, %v2966
    %2969 = vst.msk [vmem:[#allocation2] sm:$0xff] %vm150, %v2968
    // Predicated region
    $region26: #{graph_transformer.1} parent=1 // pred_check
      _
    $region27: #{graph_transformer.1} parent=1 // pred_check_branch
      %2971 = sbr.rel (0) target = $region29
    $region28: #{graph_transformer.1} parent=1 // pred_region
      %s2973 = ssub.s32 128, 128
      %2974 = vsyncadd [#allocation3], %s2973
      %s2976 = sshll.u32 [#allocation2], 4
      %s2977 = int_to_ptr.vmem [resolvable:$true] %s2976
      %2979 = dma.vmem_to_hbm [thread:$0]  %s2977, 128, %s6, [#allocation3]
    $region29: #{graph_transformer.1} parent=1 // pred_fallthru
      _
    // Predicated region
    $region30: #{graph_transformer.1} parent=1 // pred_check
      _
    $region31: #{graph_transformer.1} parent=1 // pred_check_branch
      %2981 = sbr.rel (0) target = $region33
    $region32: #{graph_transformer.1} parent=1 // pred_region
      %2982 = dma.done [#allocation3], 128
    $region33: #{graph_transformer.1} parent=1 // pred_fallthru
      _
    %2983 = vsyncpa [#allocation3], 1

</llo_original>
